<compile_context>
chip_gen: v5e
topology: v5e:2x2
jax: 0.10.0
libtpu: 0.0.40
codegen_flags: <defaults>
</compile_context>

<pallas_src>
import functools

import jax
import jax.numpy as jnp
from jax.experimental import pallas as pl
from jax.experimental.pallas import tpu as pltpu

EPS = 1e-3          # nn.BatchNorm1d(..., eps=0.001) in the PyTorch module
VOCAB = 27          # '_ACDEFGHIKLMNPQRSTVWYXBZJUO'
ALPHABET = 21


def _full_spec(shape):
    """BlockSpec covering the full array for grid=(1,)."""
    nd = len(shape)
    return pl.BlockSpec(shape, lambda i, _nd=nd: (0,) * _nd)


# -----------------------------------------------------------------------------
# Fused Pallas kernel: encoding + all conv branches + pooling + head
# -----------------------------------------------------------------------------
def _deepfam_fused_kernel(kernel_sizes, L, *refs):
    """refs = (seq, [w_emb_i, b_i] * n_branches, w1, b1, w2, b2, out).

    seq:     (B, L) int32 vocabulary-encoded sequences
    w_emb_i: (k_i, 27, F)  per-tap tables = one_hot_table @ (BN-folded conv w)
    b_i:     (1, F)        BN-folded conv bias
    w1:      (F_total, H)  BN-folded linear1 weight ; b1: (1, H)
    w2:      (H, n_classes); b2: (1, n_classes)
    out:     (B, n_classes) logits
    """
    nb = len(kernel_sizes)
    seq_ref = refs[0]
    branch_refs = refs[1:1 + 2 * nb]
    w1_ref, b1_ref, w2_ref, b2_ref, out_ref = refs[1 + 2 * nb:]

    B = seq_ref.shape[0]
    R = B * L
    max_k = max(kernel_sizes)
    pad = max(8, ((max_k - 1 + 7) // 8) * 8)          # static, >= max_k - 1

    # ---- pseudo-one-hot over the 27-symbol vocabulary ---------------------
    ids = seq_ref[...]                                              # (B, L) i32
    sym = jax.lax.broadcasted_iota(jnp.int32, (B, L, VOCAB), 2)
    oh = jnp.where(ids[:, :, None] == sym, 1.0, 0.0)                # (B, L, 27)
    oh = oh.reshape(R, VOCAB)                                       # (B*L, 27)
    ohp = jnp.concatenate(
        [oh, jnp.zeros((pad, VOCAB), jnp.float32)], axis=0)         # (R+pad, 27)

    # Position of each flattened row inside its sample -> used to mask conv
    # windows that would cross a sample boundary.
    F = branch_refs[1].shape[-1]
    pos = jax.lax.broadcasted_iota(jnp.int32, (R, F), 0) % L

    # ---- conv branches: conv + BN(eval) + ReLU + global max-pool ----------
    pooled = []
    for bi, k in enumerate(kernel_sizes):
        w_emb = branch_refs[2 * bi]       # (k, 27, F)
        bias = branch_refs[2 * bi + 1]    # (1, F)
        acc = jnp.zeros((R, F), jnp.float32)
        for dk in range(k):               # static unroll, k is tiny
            acc = acc + jnp.dot(ohp[dk:dk + R, :], w_emb[dk],
                                preferred_element_type=jnp.float32)
        y = jnp.maximum(acc + bias[...], 0.0)          # folded bias + ReLU
        valid = pos < (L - k + 1)
        # Safe masking: valid post-ReLU values are >= 0, so zeros never win.
        y = jnp.where(valid, y, 0.0)
        pooled.append(jnp.max(y.reshape(B, L, F), axis=1))          # (B, F)

    feat = jnp.concatenate(pooled, axis=1)                          # (B, F_tot)

    # ---- head: linear1 + BN(eval) + ReLU + classification ------------------
    h = jnp.dot(feat, w1_ref[...], preferred_element_type=jnp.float32)
    h = jnp.maximum(h + b1_ref[...], 0.0)
    out_ref[...] = (jnp.dot(h, w2_ref[...], preferred_element_type=jnp.float32)
                    + b2_ref[...])


# -----------------------------------------------------------------------------
# Glue: pseudo one-hot encoding table (27 x 21), matches PseudoOneHotEncoding
# -----------------------------------------------------------------------------
def _pseudo_one_hot_table():
    """Vocabulary: index 0..26 <-> '_ACDEFGHIKLMNPQRSTVWYXBZJUO'."""
    t = jnp.zeros((VOCAB, ALPHABET), jnp.float32)
    # standard amino acids A..Y plus X: vocab indices 1..21 -> cols 0..20
    t = t.at[jnp.arange(1, 22), jnp.arange(0, 21)].set(1.0)
    t = t.at[22, 2].set(0.5).at[22, 11].set(0.5)   # B = 0.5 D + 0.5 N
    t = t.at[23, 3].set(0.5).at[23, 13].set(0.5)   # Z = 0.5 E + 0.5 Q
    t = t.at[24, 7].set(0.5).at[24, 9].set(0.5)    # J = 0.5 I + 0.5 L
    # '_' (0), U (25), O (26) encode to all zeros
    return t


# -----------------------------------------------------------------------------
# Parameter init (deterministic, mirrors DeepFam.__init__ shapes / init scheme)
# -----------------------------------------------------------------------------
def init_deepfam_params(key, kernel_sizes, n_filters, hidden_units, n_classes,
                        alphabet=ALPHABET):
    params = {}
    keys = jax.random.split(key, len(kernel_sizes) + 2)

    def _bn(n):
        return dict(gamma=jnp.ones((1, n), jnp.float32),
                    beta=jnp.zeros((1, n), jnp.float32),
                    mean=jnp.zeros((1, n), jnp.float32),
                    var=jnp.ones((1, n), jnp.float32))

    for i, k in enumerate(kernel_sizes):
        fan_in, fan_out = alphabet * k, n_filters * k
        bound = (6.0 / (fan_in + fan_out)) ** 0.5      # xavier_uniform, gain=1
        w = jax.random.uniform(keys[i], (n_filters, alphabet, k),
                               jnp.float32, -bound, bound)
        params[f'conv{i + 1}_w'] = jnp.transpose(w, (2, 1, 0))  # (k, C, F)
        params[f'conv{i + 1}_b'] = jnp.full((1, n_filters), 0.01, jnp.float32)
        params[f'bn{i + 1}'] = _bn(n_filters)

    f_total = n_filters * len(kernel_sizes)
    bound = (6.0 / (f_total + hidden_units)) ** 0.5
    w1 = jax.random.uniform(keys[-2], (hidden_units, f_total),
                            jnp.float32, -bound, bound)
    params['linear1_w'] = w1.T                                   # (F_total, H)
    params['linear1_b'] = jnp.full((1, hidden_units), 0.01, jnp.float32)
    params['bn_linear'] = _bn(hidden_units)

    bound = (6.0 / (hidden_units + n_classes)) ** 0.5
    w2 = jax.random.uniform(keys[-1], (n_classes, hidden_units),
                            jnp.float32, -bound, bound)
    params['cls_w'] = w2.T                                       # (H, n_classes)
    params['cls_b'] = jnp.full((1, n_classes), 0.01, jnp.float32)
    return params


# -----------------------------------------------------------------------------
# Forward pass: fold BN/bias/table into weights, then one fused pallas_call
# -----------------------------------------------------------------------------
def deepfam_forward(seq, params, kernel_sizes, n_filters, hidden_units,
                    n_classes):
    B, L = seq.shape
    assert max(kernel_sizes) <= L
    table = _pseudo_one_hot_table()                               # (27, 21)

    ins = [seq.astype(jnp.int32)]
    in_specs = [_full_spec((B, L))]

    for i, k in enumerate(kernel_sizes):
        w = params[f'conv{i + 1}_w']                              # (k, 21, F)
        b = params[f'conv{i + 1}_b']                              # (1, F)
        bn = params[f'bn{i + 1}']
        scale = bn['gamma'] * jax.lax.rsqrt(bn['var'] + EPS)      # (1, F)
        w_fold = w * scale[None]                                  # (k, 21, F)
        b_fold = (b - bn['mean']) * scale + bn['beta']            # (1, F)
        w_emb = jnp.einsum('sc,kcf->ksf', table, w_fold)          # (k, 27, F)
        ins += [w_emb, b_fold]
        in_specs += [_full_spec(w_emb.shape), _full_spec(b_fold.shape)]

    bn = params['bn_linear']
    scale1 = bn['gamma'] * jax.lax.rsqrt(bn['var'] + EPS)
    w1f = params['linear1_w'] * scale1                            # (F_total, H)
    b1f = (params['linear1_b'] - bn['mean']) * scale1 + bn['beta']
    ins += [w1f, b1f, params['cls_w'], params['cls_b']]
    in_specs += [_full_spec(w1f.shape), _full_spec(b1f.shape),
                 _full_spec(params['cls_w'].shape),
                 _full_spec(params['cls_b'].shape)]

    kern = functools.partial(_deepfam_fused_kernel, tuple(kernel_sizes), L)
    # NOTE: if batch is scaled up, grid over batch tiles with
    # dimension_semantics=("parallel",) to use both v7x TensorCores; at this
    # toy size a single grid step keeps everything resident in VMEM.
    return pl.pallas_call(
        kern,
        grid=(1,),
        in_specs=in_specs,
        out_specs=_full_spec((B, n_classes)),
        out_shape=jax.ShapeDtypeStruct((B, n_classes), jnp.float32),
        compiler_params=pltpu.CompilerParams(
            dimension_semantics=("arbitrary",)),
    )(*ins)


if __name__ == "__main__":
    key = jax.random.PRNGKey(0)
    B, L = 4, 32
    kernel_sizes = [3, 5]
    n_filters = 32
    hidden_units = 32
    n_classes = 10

    k_seq, k_param = jax.random.split(key)
    # integer-encoded sequences over the 27-symbol vocabulary
    seq = jax.random.randint(k_seq, (B, L), 0, 27, dtype=jnp.int32)
    params = init_deepfam_params(k_param, kernel_sizes, n_filters,
                                 hidden_units, n_classes)

    out = deepfam_forward(seq, params, kernel_sizes, n_filters,
                          hidden_units, n_classes)
    out = jax.block_until_ready(out)
    assert out.shape == (B, n_classes) and out.dtype == jnp.float32
    print("KERNEL_OK")
</pallas_src>

<mosaic_0001>
module attributes {stable_mosaic.version = 11 : i64} {
  func.func @_deepfam_fused_kernel(%arg0: i32, %arg1: memref<4x32xi32, #tpu.memory_space<vmem>>, %arg2: memref<3x27x32xf32, #tpu.memory_space<vmem>>, %arg3: memref<1x32xf32, #tpu.memory_space<vmem>>, %arg4: memref<5x27x32xf32, #tpu.memory_space<vmem>>, %arg5: memref<1x32xf32, #tpu.memory_space<vmem>>, %arg6: memref<64x32xf32, #tpu.memory_space<vmem>>, %arg7: memref<1x32xf32, #tpu.memory_space<vmem>>, %arg8: memref<32x10xf32, #tpu.memory_space<vmem>>, %arg9: memref<1x10xf32, #tpu.memory_space<vmem>>, %arg10: memref<4x10xf32, #tpu.memory_space<vmem>>) attributes {dimension_semantics = [#tpu.dimension_semantics<arbitrary>], iteration_bounds = array<i64: 1>, scalar_prefetch = 0 : i64, scratch_operands = 0 : i64, tpu.core_type = #tpu.core_type<tc>, window_params = [{pipeline_mode = #tpu.pipeline_mode<synchronous>, transform_indices = @transform_0, window_bounds = array<i64: 4, 32>}, {pipeline_mode = #tpu.pipeline_mode<synchronous>, transform_indices = @transform_1, window_bounds = array<i64: 3, 27, 32>}, {pipeline_mode = #tpu.pipeline_mode<synchronous>, transform_indices = @transform_2, window_bounds = array<i64: 1, 32>}, {pipeline_mode = #tpu.pipeline_mode<synchronous>, transform_indices = @transform_3, window_bounds = array<i64: 5, 27, 32>}, {pipeline_mode = #tpu.pipeline_mode<synchronous>, transform_indices = @transform_4, window_bounds = array<i64: 1, 32>}, {pipeline_mode = #tpu.pipeline_mode<synchronous>, transform_indices = @transform_5, window_bounds = array<i64: 64, 32>}, {pipeline_mode = #tpu.pipeline_mode<synchronous>, transform_indices = @transform_6, window_bounds = array<i64: 1, 32>}, {pipeline_mode = #tpu.pipeline_mode<synchronous>, transform_indices = @transform_7, window_bounds = array<i64: 32, 10>}, {pipeline_mode = #tpu.pipeline_mode<synchronous>, transform_indices = @transform_8, window_bounds = array<i64: 1, 10>}, {pipeline_mode = #tpu.pipeline_mode<synchronous>, transform_indices = @transform_9, window_bounds = array<i64: 4, 10>}]} {
    %c0 = arith.constant 0 : index
    %c0_0 = arith.constant 0 : index
    %0 = vector.load %arg1[%c0, %c0_0] : memref<4x32xi32, #tpu.memory_space<vmem>>, vector<4x32xi32>
    %1 = tpu.iota {dimensions = array<i32: 2>} : vector<4x32x27xi32>
    %2 = vector.shape_cast %0 : vector<4x32xi32> to vector<4x32x1xi32>
    %3 = vector.broadcast %2 : vector<4x32x1xi32> to vector<4x32x27xi32>
    %4 = arith.cmpi eq, %3, %1 : vector<4x32x27xi32>
    %cst = arith.constant 1.000000e+00 : f32
    %cst_1 = arith.constant 0.000000e+00 : f32
    %5 = vector.broadcast %cst : f32 to vector<4x32x27xf32>
    %6 = vector.broadcast %cst_1 : f32 to vector<4x32x27xf32>
    %7 = arith.select %4, %5, %6 : vector<4x32x27xi1>, vector<4x32x27xf32>
    %8 = vector.shape_cast %7 : vector<4x32x27xf32> to vector<128x27xf32>
    %cst_2 = arith.constant 0.000000e+00 : f32
    %9 = vector.broadcast %cst_2 : f32 to vector<8x27xf32>
    %10 = tpu.concatenate %8, %9 in 0 : vector<128x27xf32>, vector<8x27xf32> -> vector<136x27xf32>
    %11 = tpu.iota {dimensions = array<i32: 0>} : vector<128x32xi32>
    %c32_i32 = arith.constant 32 : i32
    %c0_i32 = arith.constant 0 : i32
    %12 = arith.cmpi eq, %c32_i32, %c0_i32 : i32
    %c1_i32 = arith.constant 1 : i32
    %13 = arith.select %12, %c1_i32, %c32_i32 : i32
    %14 = vector.broadcast %13 : i32 to vector<128x32xi32>
    %15 = arith.remsi %11, %14 : vector<128x32xi32>
    %c0_i32_3 = arith.constant 0 : i32
    %16 = vector.broadcast %c0_i32_3 : i32 to vector<128x32xi32>
    %17 = arith.cmpi ne, %15, %16 : vector<128x32xi32>
    %c0_i32_4 = arith.constant 0 : i32
    %18 = vector.broadcast %c0_i32_4 : i32 to vector<128x32xi32>
    %19 = arith.cmpi slt, %15, %18 : vector<128x32xi32>
    %c0_i32_5 = arith.constant 0 : i32
    %20 = arith.cmpi slt, %13, %c0_i32_5 : i32
    %21 = vector.broadcast %20 : i1 to vector<128x32xi1>
    %22 = vector.broadcast %21 : vector<128x32xi1> to vector<128x32xi1>
    %23 = arith.xori %19, %22 : vector<128x32xi1>
    %24 = arith.andi %23, %17 : vector<128x32xi1>
    %25 = vector.broadcast %13 : i32 to vector<128x32xi32>
    %26 = arith.addi %15, %25 : vector<128x32xi32>
    %27 = arith.select %24, %26, %15 : vector<128x32xi1>, vector<128x32xi32>
    %cst_6 = arith.constant 0.000000e+00 : f32
    %28 = vector.broadcast %cst_6 : f32 to vector<128x32xf32>
    %29 = vector.extract_strided_slice %10 {offsets = [0, 0], sizes = [128, 27], strides = [1, 1]} : vector<136x27xf32> to vector<128x27xf32>
    %c0_7 = arith.constant 0 : index
    %c0_8 = arith.constant 0 : index
    %c0_9 = arith.constant 0 : index
    %30 = vector.load %arg2[%c0_7, %c0_8, %c0_9] : memref<3x27x32xf32, #tpu.memory_space<vmem>>, vector<1x27x32xf32>
    %31 = vector.shape_cast %30 : vector<1x27x32xf32> to vector<27x32xf32>
    %cst_10 = arith.constant dense<0.000000e+00> : vector<128x32xf32>
    %32 = tpu.matmul %29, %31, %cst_10 {dimension_numbers = #tpu.dot_dimension_numbers<[1], [0], [0], [1], [0, 0, 1, 1], [], []>} : vector<128x27xf32>, vector<27x32xf32>, vector<128x32xf32> -> vector<128x32xf32>
    %33 = arith.addf %28, %32 : vector<128x32xf32>
    %34 = vector.extract_strided_slice %10 {offsets = [1, 0], sizes = [128, 27], strides = [1, 1]} : vector<136x27xf32> to vector<128x27xf32>
    %c1 = arith.constant 1 : index
    %c0_11 = arith.constant 0 : index
    %c0_12 = arith.constant 0 : index
    %35 = vector.load %arg2[%c1, %c0_11, %c0_12] : memref<3x27x32xf32, #tpu.memory_space<vmem>>, vector<1x27x32xf32>
    %36 = vector.shape_cast %35 : vector<1x27x32xf32> to vector<27x32xf32>
    %cst_13 = arith.constant dense<0.000000e+00> : vector<128x32xf32>
    %37 = tpu.matmul %34, %36, %cst_13 {dimension_numbers = #tpu.dot_dimension_numbers<[1], [0], [0], [1], [0, 0, 1, 1], [], []>} : vector<128x27xf32>, vector<27x32xf32>, vector<128x32xf32> -> vector<128x32xf32>
    %38 = arith.addf %33, %37 : vector<128x32xf32>
    %39 = vector.extract_strided_slice %10 {offsets = [2, 0], sizes = [128, 27], strides = [1, 1]} : vector<136x27xf32> to vector<128x27xf32>
    %c2 = arith.constant 2 : index
    %c0_14 = arith.constant 0 : index
    %c0_15 = arith.constant 0 : index
    %40 = vector.load %arg2[%c2, %c0_14, %c0_15] : memref<3x27x32xf32, #tpu.memory_space<vmem>>, vector<1x27x32xf32>
    %41 = vector.shape_cast %40 : vector<1x27x32xf32> to vector<27x32xf32>
    %cst_16 = arith.constant dense<0.000000e+00> : vector<128x32xf32>
    %42 = tpu.matmul %39, %41, %cst_16 {dimension_numbers = #tpu.dot_dimension_numbers<[1], [0], [0], [1], [0, 0, 1, 1], [], []>} : vector<128x27xf32>, vector<27x32xf32>, vector<128x32xf32> -> vector<128x32xf32>
    %43 = arith.addf %38, %42 : vector<128x32xf32>
    %c0_17 = arith.constant 0 : index
    %c0_18 = arith.constant 0 : index
    %44 = vector.load %arg3[%c0_17, %c0_18] : memref<1x32xf32, #tpu.memory_space<vmem>>, vector<1x32xf32>
    %45 = vector.broadcast %44 : vector<1x32xf32> to vector<128x32xf32>
    %46 = arith.addf %43, %45 : vector<128x32xf32>
    %cst_19 = arith.constant 0.000000e+00 : f32
    %47 = vector.broadcast %cst_19 : f32 to vector<128x32xf32>
    %48 = arith.maximumf %46, %47 : vector<128x32xf32>
    %c30_i32 = arith.constant 30 : i32
    %49 = vector.broadcast %c30_i32 : i32 to vector<128x32xi32>
    %50 = arith.cmpi slt, %27, %49 : vector<128x32xi32>
    %cst_20 = arith.constant 0.000000e+00 : f32
    %51 = vector.broadcast %cst_20 : f32 to vector<128x32xf32>
    %52 = arith.select %50, %48, %51 : vector<128x32xi1>, vector<128x32xf32>
    %53 = vector.shape_cast %52 : vector<128x32xf32> to vector<4x32x32xf32>
    %cst_21 = arith.constant dense<0xFF800000> : vector<4x32xf32>
    %54 = vector.multi_reduction <maximumf>, %53, %cst_21 [1] : vector<4x32x32xf32> to vector<4x32xf32>
    %cst_22 = arith.constant 0.000000e+00 : f32
    %55 = vector.broadcast %cst_22 : f32 to vector<128x32xf32>
    %56 = vector.extract_strided_slice %10 {offsets = [0, 0], sizes = [128, 27], strides = [1, 1]} : vector<136x27xf32> to vector<128x27xf32>
    %c0_23 = arith.constant 0 : index
    %c0_24 = arith.constant 0 : index
    %c0_25 = arith.constant 0 : index
    %57 = vector.load %arg4[%c0_23, %c0_24, %c0_25] : memref<5x27x32xf32, #tpu.memory_space<vmem>>, vector<1x27x32xf32>
    %58 = vector.shape_cast %57 : vector<1x27x32xf32> to vector<27x32xf32>
    %cst_26 = arith.constant dense<0.000000e+00> : vector<128x32xf32>
    %59 = tpu.matmul %56, %58, %cst_26 {dimension_numbers = #tpu.dot_dimension_numbers<[1], [0], [0], [1], [0, 0, 1, 1], [], []>} : vector<128x27xf32>, vector<27x32xf32>, vector<128x32xf32> -> vector<128x32xf32>
    %60 = arith.addf %55, %59 : vector<128x32xf32>
    %61 = vector.extract_strided_slice %10 {offsets = [1, 0], sizes = [128, 27], strides = [1, 1]} : vector<136x27xf32> to vector<128x27xf32>
    %c1_27 = arith.constant 1 : index
    %c0_28 = arith.constant 0 : index
    %c0_29 = arith.constant 0 : index
    %62 = vector.load %arg4[%c1_27, %c0_28, %c0_29] : memref<5x27x32xf32, #tpu.memory_space<vmem>>, vector<1x27x32xf32>
    %63 = vector.shape_cast %62 : vector<1x27x32xf32> to vector<27x32xf32>
    %cst_30 = arith.constant dense<0.000000e+00> : vector<128x32xf32>
    %64 = tpu.matmul %61, %63, %cst_30 {dimension_numbers = #tpu.dot_dimension_numbers<[1], [0], [0], [1], [0, 0, 1, 1], [], []>} : vector<128x27xf32>, vector<27x32xf32>, vector<128x32xf32> -> vector<128x32xf32>
    %65 = arith.addf %60, %64 : vector<128x32xf32>
    %66 = vector.extract_strided_slice %10 {offsets = [2, 0], sizes = [128, 27], strides = [1, 1]} : vector<136x27xf32> to vector<128x27xf32>
    %c2_31 = arith.constant 2 : index
    %c0_32 = arith.constant 0 : index
    %c0_33 = arith.constant 0 : index
    %67 = vector.load %arg4[%c2_31, %c0_32, %c0_33] : memref<5x27x32xf32, #tpu.memory_space<vmem>>, vector<1x27x32xf32>
    %68 = vector.shape_cast %67 : vector<1x27x32xf32> to vector<27x32xf32>
    %cst_34 = arith.constant dense<0.000000e+00> : vector<128x32xf32>
    %69 = tpu.matmul %66, %68, %cst_34 {dimension_numbers = #tpu.dot_dimension_numbers<[1], [0], [0], [1], [0, 0, 1, 1], [], []>} : vector<128x27xf32>, vector<27x32xf32>, vector<128x32xf32> -> vector<128x32xf32>
    %70 = arith.addf %65, %69 : vector<128x32xf32>
    %71 = vector.extract_strided_slice %10 {offsets = [3, 0], sizes = [128, 27], strides = [1, 1]} : vector<136x27xf32> to vector<128x27xf32>
    %c3 = arith.constant 3 : index
    %c0_35 = arith.constant 0 : index
    %c0_36 = arith.constant 0 : index
    %72 = vector.load %arg4[%c3, %c0_35, %c0_36] : memref<5x27x32xf32, #tpu.memory_space<vmem>>, vector<1x27x32xf32>
    %73 = vector.shape_cast %72 : vector<1x27x32xf32> to vector<27x32xf32>
    %cst_37 = arith.constant dense<0.000000e+00> : vector<128x32xf32>
    %74 = tpu.matmul %71, %73, %cst_37 {dimension_numbers = #tpu.dot_dimension_numbers<[1], [0], [0], [1], [0, 0, 1, 1], [], []>} : vector<128x27xf32>, vector<27x32xf32>, vector<128x32xf32> -> vector<128x32xf32>
    %75 = arith.addf %70, %74 : vector<128x32xf32>
    %76 = vector.extract_strided_slice %10 {offsets = [4, 0], sizes = [128, 27], strides = [1, 1]} : vector<136x27xf32> to vector<128x27xf32>
    %c4 = arith.constant 4 : index
    %c0_38 = arith.constant 0 : index
    %c0_39 = arith.constant 0 : index
    %77 = vector.load %arg4[%c4, %c0_38, %c0_39] : memref<5x27x32xf32, #tpu.memory_space<vmem>>, vector<1x27x32xf32>
    %78 = vector.shape_cast %77 : vector<1x27x32xf32> to vector<27x32xf32>
    %cst_40 = arith.constant dense<0.000000e+00> : vector<128x32xf32>
    %79 = tpu.matmul %76, %78, %cst_40 {dimension_numbers = #tpu.dot_dimension_numbers<[1], [0], [0], [1], [0, 0, 1, 1], [], []>} : vector<128x27xf32>, vector<27x32xf32>, vector<128x32xf32> -> vector<128x32xf32>
    %80 = arith.addf %75, %79 : vector<128x32xf32>
    %c0_41 = arith.constant 0 : index
    %c0_42 = arith.constant 0 : index
    %81 = vector.load %arg5[%c0_41, %c0_42] : memref<1x32xf32, #tpu.memory_space<vmem>>, vector<1x32xf32>
    %82 = vector.broadcast %81 : vector<1x32xf32> to vector<128x32xf32>
    %83 = arith.addf %80, %82 : vector<128x32xf32>
    %cst_43 = arith.constant 0.000000e+00 : f32
    %84 = vector.broadcast %cst_43 : f32 to vector<128x32xf32>
    %85 = arith.maximumf %83, %84 : vector<128x32xf32>
    %c28_i32 = arith.constant 28 : i32
    %86 = vector.broadcast %c28_i32 : i32 to vector<128x32xi32>
    %87 = arith.cmpi slt, %27, %86 : vector<128x32xi32>
    %cst_44 = arith.constant 0.000000e+00 : f32
    %88 = vector.broadcast %cst_44 : f32 to vector<128x32xf32>
    %89 = arith.select %87, %85, %88 : vector<128x32xi1>, vector<128x32xf32>
    %90 = vector.shape_cast %89 : vector<128x32xf32> to vector<4x32x32xf32>
    %cst_45 = arith.constant dense<0xFF800000> : vector<4x32xf32>
    %91 = vector.multi_reduction <maximumf>, %90, %cst_45 [1] : vector<4x32x32xf32> to vector<4x32xf32>
    %92 = tpu.concatenate %54, %91 in 1 : vector<4x32xf32>, vector<4x32xf32> -> vector<4x64xf32>
    %c0_46 = arith.constant 0 : index
    %c0_47 = arith.constant 0 : index
    %93 = vector.load %arg6[%c0_46, %c0_47] : memref<64x32xf32, #tpu.memory_space<vmem>>, vector<64x32xf32>
    %cst_48 = arith.constant dense<0.000000e+00> : vector<4x32xf32>
    %94 = tpu.matmul %92, %93, %cst_48 {dimension_numbers = #tpu.dot_dimension_numbers<[1], [0], [0], [1], [0, 0, 1, 1], [], []>} : vector<4x64xf32>, vector<64x32xf32>, vector<4x32xf32> -> vector<4x32xf32>
    %c0_49 = arith.constant 0 : index
    %c0_50 = arith.constant 0 : index
    %95 = vector.load %arg7[%c0_49, %c0_50] : memref<1x32xf32, #tpu.memory_space<vmem>>, vector<1x32xf32>
    %96 = vector.broadcast %95 : vector<1x32xf32> to vector<4x32xf32>
    %97 = arith.addf %94, %96 : vector<4x32xf32>
    %cst_51 = arith.constant 0.000000e+00 : f32
    %98 = vector.broadcast %cst_51 : f32 to vector<4x32xf32>
    %99 = arith.maximumf %97, %98 : vector<4x32xf32>
    %c0_52 = arith.constant 0 : index
    %c0_53 = arith.constant 0 : index
    %100 = vector.load %arg8[%c0_52, %c0_53] : memref<32x10xf32, #tpu.memory_space<vmem>>, vector<32x10xf32>
    %cst_54 = arith.constant dense<0.000000e+00> : vector<4x10xf32>
    %101 = tpu.matmul %99, %100, %cst_54 {dimension_numbers = #tpu.dot_dimension_numbers<[1], [0], [0], [1], [0, 0, 1, 1], [], []>} : vector<4x32xf32>, vector<32x10xf32>, vector<4x10xf32> -> vector<4x10xf32>
    %c0_55 = arith.constant 0 : index
    %c0_56 = arith.constant 0 : index
    %102 = vector.load %arg9[%c0_55, %c0_56] : memref<1x10xf32, #tpu.memory_space<vmem>>, vector<1x10xf32>
    %103 = vector.broadcast %102 : vector<1x10xf32> to vector<4x10xf32>
    %104 = arith.addf %101, %103 : vector<4x10xf32>
    %c0_57 = arith.constant 0 : index
    %c0_58 = arith.constant 0 : index
    %105 = vector.load %arg10[%c0_57, %c0_58] : memref<4x10xf32, #tpu.memory_space<vmem>>, vector<4x10xf32>
    tpu.vector_store %arg10[%c0_57, %c0_58], %104 {strides = array<i32>} : memref<4x10xf32, #tpu.memory_space<vmem>>, vector<4x10xf32>,
    return
  }
  func.func @transform_0(%arg0: i32) -> (i32, i32) {
    %c0_i32 = arith.constant 0 : i32
    %c0_i32_0 = arith.constant 0 : i32
    %c0_i32_1 = arith.constant 0 : i32
    return %c0_i32, %c0_i32_0 : i32, i32
  }
  func.func @transform_1(%arg0: i32) -> (i32, i32, i32) {
    %c0_i32 = arith.constant 0 : i32
    %c0_i32_0 = arith.constant 0 : i32
    %c0_i32_1 = arith.constant 0 : i32
    %c0_i32_2 = arith.constant 0 : i32
    return %c0_i32, %c0_i32_0, %c0_i32_1 : i32, i32, i32
  }
  func.func @transform_2(%arg0: i32) -> (i32, i32) {
    %c0_i32 = arith.constant 0 : i32
    %c0_i32_0 = arith.constant 0 : i32
    %c0_i32_1 = arith.constant 0 : i32
    return %c0_i32, %c0_i32_0 : i32, i32
  }
  func.func @transform_3(%arg0: i32) -> (i32, i32, i32) {
    %c0_i32 = arith.constant 0 : i32
    %c0_i32_0 = arith.constant 0 : i32
    %c0_i32_1 = arith.constant 0 : i32
    %c0_i32_2 = arith.constant 0 : i32
    return %c0_i32, %c0_i32_0, %c0_i32_1 : i32, i32, i32
  }
  func.func @transform_4(%arg0: i32) -> (i32, i32) {
    %c0_i32 = arith.constant 0 : i32
    %c0_i32_0 = arith.constant 0 : i32
    %c0_i32_1 = arith.constant 0 : i32
    return %c0_i32, %c0_i32_0 : i32, i32
  }
  func.func @transform_5(%arg0: i32) -> (i32, i32) {
    %c0_i32 = arith.constant 0 : i32
    %c0_i32_0 = arith.constant 0 : i32
    %c0_i32_1 = arith.constant 0 : i32
    return %c0_i32, %c0_i32_0 : i32, i32
  }
  func.func @transform_6(%arg0: i32) -> (i32, i32) {
    %c0_i32 = arith.constant 0 : i32
    %c0_i32_0 = arith.constant 0 : i32
    %c0_i32_1 = arith.constant 0 : i32
    return %c0_i32, %c0_i32_0 : i32, i32
  }
  func.func @transform_7(%arg0: i32) -> (i32, i32) {
    %c0_i32 = arith.constant 0 : i32
    %c0_i32_0 = arith.constant 0 : i32
    %c0_i32_1 = arith.constant 0 : i32
    return %c0_i32, %c0_i32_0 : i32, i32
  }
  func.func @transform_8(%arg0: i32) -> (i32, i32) {
    %c0_i32 = arith.constant 0 : i32
    %c0_i32_0 = arith.constant 0 : i32
    %c0_i32_1 = arith.constant 0 : i32
    return %c0_i32, %c0_i32_0 : i32, i32
  }
  func.func @transform_9(%arg0: i32) -> (i32, i32) {
    %c0_i32 = arith.constant 0 : i32
    %c0_i32_0 = arith.constant 0 : i32
    %c0_i32_1 = arith.constant 0 : i32
    return %c0_i32, %c0_i32_0 : i32, i32
  }
}

</mosaic_0001>

<llo_original>
// kernel: tpu_custom_call.1
$region0: #{tpu_custom_call.1}
  #allocation0 [shape = 'u32[]', space=smem, size = 0x4, offset = 0x4, fixed_abs, tag = 'smem constant byte address 0x4 - core index']
  #allocation1 [shape = 'u32[72,128]{1,0:T(1,128)}', space=vmem, size = 0x9000, scoped, tag = 'internal scratch']
  %s0 = inlined_call_operand.vmem [shape: s32[4,32], index: 0, kind: input, shape index: {}]
  %s1 = inlined_call_operand.vmem [shape: f32[3,27,32], index: 1, kind: input, shape index: {}]
  %s2 = inlined_call_operand.vmem [shape: f32[1,32], index: 2, kind: input, shape index: {}]
  %s3 = inlined_call_operand.hbm [shape: f32[5,27,32], index: 3, kind: input, shape index: {}]
  %s4 = inlined_call_operand.vmem [shape: f32[1,32], index: 4, kind: input, shape index: {}]
  %s5 = inlined_call_operand.vmem [shape: f32[64,32], index: 5, kind: input, shape index: {}]
  %s6 = inlined_call_operand.vmem [shape: f32[1,32], index: 6, kind: input, shape index: {}]
  %s7 = inlined_call_operand.vmem [shape: f32[32,10], index: 7, kind: input, shape index: {}]
  %s8 = inlined_call_operand.vmem [shape: f32[1,10], index: 8, kind: input, shape index: {}]
  %s9 = inlined_call_operand.hbm [shape: f32[4,10], index: 9, kind: output, shape index: {}]
  %s10 = sld [smem:[#allocation0]]
  $region50: #{tpu_custom_call.1} parent=0
    _
  %s12 = ssub.s32 1, %s10
  %s13 = scalar_select 0, %s12, %s10
  $region1: #{tpu_custom_call.1} parent=0
    #allocation2 [shape = 'u8[81920]{0}', space=vmem, size = 0x14000, scoped, tag = 'input window, operand 3, single buffered']
    #allocation3 [shape = 's32[1]{0}', space=sflag, size = 0x4, scoped, tag = 'scoped memory for tpu_custom_call.1']
    #allocation4 [shape = 's32[1]{0}', space=sflag, size = 0x4, scoped, tag = 'scoped memory for tpu_custom_call.1']
    #allocation5 [shape = 'u8[2048]{0}', space=vmem, size = 0x800, scoped, tag = 'output window, operand 0, single buffered']
    %14 = vsyncpa [#allocation3], 0
    %15 = vsyncpa [#allocation4], 0
    // Predicated region
    $region2: #{tpu_custom_call.1} parent=1 // pred_check
      _
    $region3: #{tpu_custom_call.1} parent=1 // pred_check_branch
      %17 = sbr.rel (0) target = $region5
    $region4: #{tpu_custom_call.1} parent=1 // pred_region
      _
    $region5: #{tpu_custom_call.1} parent=1 // pred_fallthru
      _
    // Predicated region
    $region6: #{tpu_custom_call.1} parent=1 // pred_check
      _
    $region7: #{tpu_custom_call.1} parent=1 // pred_check_branch
      %19 = sbr.rel (0) target = $region9
    $region8: #{tpu_custom_call.1} parent=1 // pred_region
      _
    $region9: #{tpu_custom_call.1} parent=1 // pred_fallthru
      _
    // Predicated region
    $region10: #{tpu_custom_call.1} parent=1 // pred_check
      _
    $region11: #{tpu_custom_call.1} parent=1 // pred_check_branch
      %21 = sbr.rel (0) target = $region13
    $region12: #{tpu_custom_call.1} parent=1 // pred_region
      _
    $region13: #{tpu_custom_call.1} parent=1 // pred_fallthru
      _
    // Predicated region
    $region14: #{tpu_custom_call.1} parent=1 // pred_check
      _
    $region15: #{tpu_custom_call.1} parent=1 // pred_check_branch
      %23 = sbr.rel (0) target = $region17
    $region16: #{tpu_custom_call.1} parent=1 // pred_region
      %25 = vsyncadd [#allocation3], 0
      %s26 = sshll.u32 %s3, 4
      %s27 = int_to_ptr.hbm [resolvable:$true] %s26
      %s28 = sshll.u32 [#allocation2], 4
      %s29 = int_to_ptr.vmem [resolvable:$true] %s28
      %34 = dma.hbm_to_vmem [thread:$0]  %s27, 2560, %s29, [#allocation3], 128, 128, 8
    $region17: #{tpu_custom_call.1} parent=1 // pred_fallthru
      _
    // Predicated region
    $region18: #{tpu_custom_call.1} parent=1 // pred_check
      _
    $region19: #{tpu_custom_call.1} parent=1 // pred_check_branch
      %36 = sbr.rel (0) target = $region21
    $region20: #{tpu_custom_call.1} parent=1 // pred_region
      _
    $region21: #{tpu_custom_call.1} parent=1 // pred_fallthru
      _
    // Predicated region
    $region22: #{tpu_custom_call.1} parent=1 // pred_check
      _
    $region23: #{tpu_custom_call.1} parent=1 // pred_check_branch
      %38 = sbr.rel (0) target = $region25
    $region24: #{tpu_custom_call.1} parent=1 // pred_region
      _
    $region25: #{tpu_custom_call.1} parent=1 // pred_fallthru
      _
    // Predicated region
    $region26: #{tpu_custom_call.1} parent=1 // pred_check
      _
    $region27: #{tpu_custom_call.1} parent=1 // pred_check_branch
      %40 = sbr.rel (0) target = $region29
    $region28: #{tpu_custom_call.1} parent=1 // pred_region
      _
    $region29: #{tpu_custom_call.1} parent=1 // pred_fallthru
      _
    // Predicated region
    $region30: #{tpu_custom_call.1} parent=1 // pred_check
      _
    $region31: #{tpu_custom_call.1} parent=1 // pred_check_branch
      %42 = sbr.rel (0) target = $region33
    $region32: #{tpu_custom_call.1} parent=1 // pred_region
      _
    $region33: #{tpu_custom_call.1} parent=1 // pred_fallthru
      _
    // Predicated region
    $region34: #{tpu_custom_call.1} parent=1 // pred_check
      _
    $region35: #{tpu_custom_call.1} parent=1 // pred_check_branch
      %44 = sbr.rel (0) target = $region37
    $region36: #{tpu_custom_call.1} parent=1 // pred_region
      _
    $region37: #{tpu_custom_call.1} parent=1 // pred_fallthru
      _
    // Predicated region
    $region38: #{tpu_custom_call.1} parent=1 // pred_check
      _
    $region39: #{tpu_custom_call.1} parent=1 // pred_check_branch
      %46 = sbr.rel (0) target = $region41
    $region40: #{tpu_custom_call.1} parent=1 // pred_region
      %48 = dma.done [#allocation3], 2560
    $region41: #{tpu_custom_call.1} parent=1 // pred_fallthru
      _
    %v49 = vld [vmem:[%s0] sm:$0xf]
    %v50 = vlaneseq
    %v51 = vand.u32 %v50, 127
    %v52 = vperm.slane %v49, 0
    %v53 = vlaneseq
    %v54 = vshrl.u32 %v53, 7
    %56 = vset.pattern.permute.xlu0 %v54
    %57 = vperm.xlu0 %56, %v52
    %v58 = vpop.permute.xlu0 %57
    %v59 = vlaneseq
    %v60 = vshrl.u32 %v59, 7
    %v61 = vadd.s32 %v60, 8
    %62 = vset.pattern.permute.xlu0 %v61
    %63 = vperm.xlu0 %62, %v52
    %v64 = vpop.permute.xlu0 %63
    %v65 = vlaneseq
    %v66 = vshrl.u32 %v65, 7
    %v67 = vadd.s32 %v66, 16
    %68 = vset.pattern.permute.xlu0 %v67
    %69 = vperm.xlu0 %68, %v52
    %v70 = vpop.permute.xlu0 %69
    %v71 = vlaneseq
    %v72 = vshrl.u32 %v71, 7
    %v73 = vadd.s32 %v72, 24
    %74 = vset.pattern.permute.xlu0 %v73
    %75 = vperm.xlu0 %74, %v52
    %v76 = vpop.permute.xlu0 %75
    %v77 = vperm.slane %v49, 1
    %v78 = vlaneseq
    %v79 = vshrl.u32 %v78, 7
    %81 = vset.pattern.permute.xlu0 %v79
    %82 = vperm.xlu0 %81, %v77
    %v83 = vpop.permute.xlu0 %82
    %v84 = vlaneseq
    %v85 = vshrl.u32 %v84, 7
    %v86 = vadd.s32 %v85, 8
    %87 = vset.pattern.permute.xlu0 %v86
    %88 = vperm.xlu0 %87, %v77
    %v89 = vpop.permute.xlu0 %88
    %v90 = vlaneseq
    %v91 = vshrl.u32 %v90, 7
    %v92 = vadd.s32 %v91, 16
    %93 = vset.pattern.permute.xlu0 %v92
    %94 = vperm.xlu0 %93, %v77
    %v95 = vpop.permute.xlu0 %94
    %v96 = vlaneseq
    %v97 = vshrl.u32 %v96, 7
    %v98 = vadd.s32 %v97, 24
    %99 = vset.pattern.permute.xlu0 %v98
    %100 = vperm.xlu0 %99, %v77
    %v101 = vpop.permute.xlu0 %100
    %v102 = vperm.slane %v49, 2
    %v103 = vlaneseq
    %v104 = vshrl.u32 %v103, 7
    %106 = vset.pattern.permute.xlu0 %v104
    %107 = vperm.xlu0 %106, %v102
    %v108 = vpop.permute.xlu0 %107
    %v109 = vlaneseq
    %v110 = vshrl.u32 %v109, 7
    %v111 = vadd.s32 %v110, 8
    %112 = vset.pattern.permute.xlu0 %v111
    %113 = vperm.xlu0 %112, %v102
    %v114 = vpop.permute.xlu0 %113
    %v115 = vlaneseq
    %v116 = vshrl.u32 %v115, 7
    %v117 = vadd.s32 %v116, 16
    %118 = vset.pattern.permute.xlu0 %v117
    %119 = vperm.xlu0 %118, %v102
    %v120 = vpop.permute.xlu0 %119
    %v121 = vlaneseq
    %v122 = vshrl.u32 %v121, 7
    %v123 = vadd.s32 %v122, 24
    %124 = vset.pattern.permute.xlu0 %v123
    %125 = vperm.xlu0 %124, %v102
    %v126 = vpop.permute.xlu0 %125
    %v127 = vperm.slane %v49, 3
    %v128 = vlaneseq
    %v129 = vshrl.u32 %v128, 7
    %131 = vset.pattern.permute.xlu0 %v129
    %132 = vperm.xlu0 %131, %v127
    %v133 = vpop.permute.xlu0 %132
    %v134 = vlaneseq
    %v135 = vshrl.u32 %v134, 7
    %v136 = vadd.s32 %v135, 8
    %137 = vset.pattern.permute.xlu0 %v136
    %138 = vperm.xlu0 %137, %v127
    %v139 = vpop.permute.xlu0 %138
    %v140 = vlaneseq
    %v141 = vshrl.u32 %v140, 7
    %v142 = vadd.s32 %v141, 16
    %143 = vset.pattern.permute.xlu0 %v142
    %144 = vperm.xlu0 %143, %v127
    %v145 = vpop.permute.xlu0 %144
    %v146 = vlaneseq
    %v147 = vshrl.u32 %v146, 7
    %v148 = vadd.s32 %v147, 24
    %149 = vset.pattern.permute.xlu0 %v148
    %150 = vperm.xlu0 %149, %v127
    %v151 = vpop.permute.xlu0 %150
    %vm152 = vcmp.eq.s32.totalorder %v58, %v51
    %vm153 = vcmp.eq.s32.totalorder %v64, %v51
    %vm154 = vcmp.eq.s32.totalorder %v70, %v51
    %vm155 = vcmp.eq.s32.totalorder %v76, %v51
    %vm156 = vcmp.eq.s32.totalorder %v83, %v51
    %vm157 = vcmp.eq.s32.totalorder %v89, %v51
    %vm158 = vcmp.eq.s32.totalorder %v95, %v51
    %vm159 = vcmp.eq.s32.totalorder %v101, %v51
    %vm160 = vcmp.eq.s32.totalorder %v108, %v51
    %vm161 = vcmp.eq.s32.totalorder %v114, %v51
    %vm162 = vcmp.eq.s32.totalorder %v120, %v51
    %vm163 = vcmp.eq.s32.totalorder %v126, %v51
    %vm164 = vcmp.eq.s32.totalorder %v133, %v51
    %vm165 = vcmp.eq.s32.totalorder %v139, %v51
    %vm166 = vcmp.eq.s32.totalorder %v145, %v51
    %vm167 = vcmp.eq.s32.totalorder %v151, %v51
    %v168 = vsel %vm152, 1.0, 0.0
    %v169 = vsel %vm153, 1.0, 0.0
    %v170 = vsel %vm154, 1.0, 0.0
    %v171 = vsel %vm155, 1.0, 0.0
    %v172 = vsel %vm156, 1.0, 0.0
    %v173 = vsel %vm157, 1.0, 0.0
    %v174 = vsel %vm158, 1.0, 0.0
    %v175 = vsel %vm159, 1.0, 0.0
    %v176 = vsel %vm160, 1.0, 0.0
    %v177 = vsel %vm161, 1.0, 0.0
    %v178 = vsel %vm162, 1.0, 0.0
    %v179 = vsel %vm163, 1.0, 0.0
    %v180 = vsel %vm164, 1.0, 0.0
    %v181 = vsel %vm165, 1.0, 0.0
    %v182 = vsel %vm166, 1.0, 0.0
    %v183 = vsel %vm167, 1.0, 0.0
    %v184 = vlaneseq
    %v185 = vshrl.u32 %v184, 7
    %v186 = vadd.s32 %v185, 8
    %v187 = vadd.s32 %v185, 16
    %v188 = vadd.s32 %v185, 24
    %v189 = vadd.s32 %v185, 32
    %v190 = vadd.s32 %v185, 40
    %v191 = vadd.s32 %v185, 48
    %v192 = vadd.s32 %v185, 56
    %v193 = vadd.s32 %v185, 64
    %v194 = vadd.s32 %v185, 72
    %v195 = vadd.s32 %v185, 80
    %v196 = vadd.s32 %v185, 88
    %v197 = vadd.s32 %v185, 96
    %v198 = vadd.s32 %v185, 104
    %v199 = vadd.s32 %v185, 112
    %v200 = vadd.s32 %v185, 120
    %vm201 = vcmp.lt.s32.totalorder %v185, 0
    %v202 = vsub.s32 0, %v185
    %v203 = vsel %vm201, %v202, %v185
    %v204 = vshrl.u32 %v203, 5
    %v205 = vand.u32 %v203, 31
    %v206 = vsub.s32 0, %v205
    %v207 = vsel %vm201, %v206, %v205
    %vm208 = vcmp.lt.s32.totalorder %v186, 0
    %v209 = vsub.s32 0, %v186
    %v210 = vsel %vm208, %v209, %v186
    %v211 = vshrl.u32 %v210, 5
    %v212 = vand.u32 %v210, 31
    %v213 = vsub.s32 0, %v212
    %v214 = vsel %vm208, %v213, %v212
    %vm215 = vcmp.lt.s32.totalorder %v187, 0
    %v216 = vsub.s32 0, %v187
    %v217 = vsel %vm215, %v216, %v187
    %v218 = vshrl.u32 %v217, 5
    %v219 = vand.u32 %v217, 31
    %v220 = vsub.s32 0, %v219
    %v221 = vsel %vm215, %v220, %v219
    %vm222 = vcmp.lt.s32.totalorder %v188, 0
    %v223 = vsub.s32 0, %v188
    %v224 = vsel %vm222, %v223, %v188
    %v225 = vshrl.u32 %v224, 5
    %v226 = vand.u32 %v224, 31
    %v227 = vsub.s32 0, %v226
    %v228 = vsel %vm222, %v227, %v226
    %vm229 = vcmp.lt.s32.totalorder %v189, 0
    %v230 = vsub.s32 0, %v189
    %v231 = vsel %vm229, %v230, %v189
    %v232 = vshrl.u32 %v231, 5
    %v233 = vand.u32 %v231, 31
    %v234 = vsub.s32 0, %v233
    %v235 = vsel %vm229, %v234, %v233
    %vm236 = vcmp.lt.s32.totalorder %v190, 0
    %v237 = vsub.s32 0, %v190
    %v238 = vsel %vm236, %v237, %v190
    %v239 = vshrl.u32 %v238, 5
    %v240 = vand.u32 %v238, 31
    %v241 = vsub.s32 0, %v240
    %v242 = vsel %vm236, %v241, %v240
    %vm243 = vcmp.lt.s32.totalorder %v191, 0
    %v244 = vsub.s32 0, %v191
    %v245 = vsel %vm243, %v244, %v191
    %v246 = vshrl.u32 %v245, 5
    %v247 = vand.u32 %v245, 31
    %v248 = vsub.s32 0, %v247
    %v249 = vsel %vm243, %v248, %v247
    %vm250 = vcmp.lt.s32.totalorder %v192, 0
    %v251 = vsub.s32 0, %v192
    %v252 = vsel %vm250, %v251, %v192
    %v253 = vshrl.u32 %v252, 5
    %v254 = vand.u32 %v252, 31
    %v255 = vsub.s32 0, %v254
    %v256 = vsel %vm250, %v255, %v254
    %vm257 = vcmp.lt.s32.totalorder %v193, 0
    %v258 = vsub.s32 0, %v193
    %v259 = vsel %vm257, %v258, %v193
    %v260 = vshrl.u32 %v259, 5
    %v261 = vand.u32 %v259, 31
    %v262 = vsub.s32 0, %v261
    %v263 = vsel %vm257, %v262, %v261
    %vm264 = vcmp.lt.s32.totalorder %v194, 0
    %v265 = vsub.s32 0, %v194
    %v266 = vsel %vm264, %v265, %v194
    %v267 = vshrl.u32 %v266, 5
    %v268 = vand.u32 %v266, 31
    %v269 = vsub.s32 0, %v268
    %v270 = vsel %vm264, %v269, %v268
    %vm271 = vcmp.lt.s32.totalorder %v195, 0
    %v272 = vsub.s32 0, %v195
    %v273 = vsel %vm271, %v272, %v195
    %v274 = vshrl.u32 %v273, 5
    %v275 = vand.u32 %v273, 31
    %v276 = vsub.s32 0, %v275
    %v277 = vsel %vm271, %v276, %v275
    %vm278 = vcmp.lt.s32.totalorder %v196, 0
    %v279 = vsub.s32 0, %v196
    %v280 = vsel %vm278, %v279, %v196
    %v281 = vshrl.u32 %v280, 5
    %v282 = vand.u32 %v280, 31
    %v283 = vsub.s32 0, %v282
    %v284 = vsel %vm278, %v283, %v282
    %vm285 = vcmp.lt.s32.totalorder %v197, 0
    %v286 = vsub.s32 0, %v197
    %v287 = vsel %vm285, %v286, %v197
    %v288 = vshrl.u32 %v287, 5
    %v289 = vand.u32 %v287, 31
    %v290 = vsub.s32 0, %v289
    %v291 = vsel %vm285, %v290, %v289
    %vm292 = vcmp.lt.s32.totalorder %v198, 0
    %v293 = vsub.s32 0, %v198
    %v294 = vsel %vm292, %v293, %v198
    %v295 = vshrl.u32 %v294, 5
    %v296 = vand.u32 %v294, 31
    %v297 = vsub.s32 0, %v296
    %v298 = vsel %vm292, %v297, %v296
    %vm299 = vcmp.lt.s32.totalorder %v199, 0
    %v300 = vsub.s32 0, %v199
    %v301 = vsel %vm299, %v300, %v199
    %v302 = vshrl.u32 %v301, 5
    %v303 = vand.u32 %v301, 31
    %v304 = vsub.s32 0, %v303
    %v305 = vsel %vm299, %v304, %v303
    %vm306 = vcmp.lt.s32.totalorder %v200, 0
    %v307 = vsub.s32 0, %v200
    %v308 = vsel %vm306, %v307, %v200
    %v309 = vshrl.u32 %v308, 5
    %v310 = vand.u32 %v308, 31
    %v311 = vsub.s32 0, %v310
    %v312 = vsel %vm306, %v311, %v310
    %vm313 = vcmp.ne.s32.totalorder %v207, 0
    %vm314 = vcmp.ne.s32.totalorder %v214, 0
    %vm315 = vcmp.ne.s32.totalorder %v221, 0
    %vm316 = vcmp.ne.s32.totalorder %v228, 0
    %vm317 = vcmp.ne.s32.totalorder %v235, 0
    %vm318 = vcmp.ne.s32.totalorder %v242, 0
    %vm319 = vcmp.ne.s32.totalorder %v249, 0
    %vm320 = vcmp.ne.s32.totalorder %v256, 0
    %vm321 = vcmp.ne.s32.totalorder %v263, 0
    %vm322 = vcmp.ne.s32.totalorder %v270, 0
    %vm323 = vcmp.ne.s32.totalorder %v277, 0
    %vm324 = vcmp.ne.s32.totalorder %v284, 0
    %vm325 = vcmp.ne.s32.totalorder %v291, 0
    %vm326 = vcmp.ne.s32.totalorder %v298, 0
    %vm327 = vcmp.ne.s32.totalorder %v305, 0
    %vm328 = vcmp.ne.s32.totalorder %v312, 0
    %vm329 = vcmp.lt.s32.totalorder %v207, 0
    %vm330 = vcmp.lt.s32.totalorder %v214, 0
    %vm331 = vcmp.lt.s32.totalorder %v221, 0
    %vm332 = vcmp.lt.s32.totalorder %v228, 0
    %vm333 = vcmp.lt.s32.totalorder %v235, 0
    %vm334 = vcmp.lt.s32.totalorder %v242, 0
    %vm335 = vcmp.lt.s32.totalorder %v249, 0
    %vm336 = vcmp.lt.s32.totalorder %v256, 0
    %vm337 = vcmp.lt.s32.totalorder %v263, 0
    %vm338 = vcmp.lt.s32.totalorder %v270, 0
    %vm339 = vcmp.lt.s32.totalorder %v277, 0
    %vm340 = vcmp.lt.s32.totalorder %v284, 0
    %vm341 = vcmp.lt.s32.totalorder %v291, 0
    %vm342 = vcmp.lt.s32.totalorder %v298, 0
    %vm343 = vcmp.lt.s32.totalorder %v305, 0
    %vm344 = vcmp.lt.s32.totalorder %v312, 0
    %vm345 = vmand %vm329, %vm313
    %vm346 = vmand %vm330, %vm314
    %vm347 = vmand %vm331, %vm315
    %vm348 = vmand %vm332, %vm316
    %vm349 = vmand %vm333, %vm317
    %vm350 = vmand %vm334, %vm318
    %vm351 = vmand %vm335, %vm319
    %vm352 = vmand %vm336, %vm320
    %vm353 = vmand %vm337, %vm321
    %vm354 = vmand %vm338, %vm322
    %vm355 = vmand %vm339, %vm323
    %vm356 = vmand %vm340, %vm324
    %vm357 = vmand %vm341, %vm325
    %vm358 = vmand %vm342, %vm326
    %vm359 = vmand %vm343, %vm327
    %vm360 = vmand %vm344, %vm328
    %v361 = vadd.s32 %v207, 32
    %v362 = vadd.s32 %v214, 32
    %v363 = vadd.s32 %v221, 32
    %v364 = vadd.s32 %v228, 32
    %v365 = vadd.s32 %v235, 32
    %v366 = vadd.s32 %v242, 32
    %v367 = vadd.s32 %v249, 32
    %v368 = vadd.s32 %v256, 32
    %v369 = vadd.s32 %v263, 32
    %v370 = vadd.s32 %v270, 32
    %v371 = vadd.s32 %v277, 32
    %v372 = vadd.s32 %v284, 32
    %v373 = vadd.s32 %v291, 32
    %v374 = vadd.s32 %v298, 32
    %v375 = vadd.s32 %v305, 32
    %v376 = vadd.s32 %v312, 32
    %v377 = vsel %vm345, %v361, %v207
    %v378 = vsel %vm346, %v362, %v214
    %v379 = vsel %vm347, %v363, %v221
    %v380 = vsel %vm348, %v364, %v228
    %v381 = vsel %vm349, %v365, %v235
    %v382 = vsel %vm350, %v366, %v242
    %v383 = vsel %vm351, %v367, %v249
    %v384 = vsel %vm352, %v368, %v256
    %v385 = vsel %vm353, %v369, %v263
    %v386 = vsel %vm354, %v370, %v270
    %v387 = vsel %vm355, %v371, %v277
    %v388 = vsel %vm356, %v372, %v284
    %v389 = vsel %vm357, %v373, %v291
    %v390 = vsel %vm358, %v374, %v298
    %v391 = vsel %vm359, %v375, %v305
    %v392 = vsel %vm360, %v376, %v312
    %v393 = vld [vmem:[%s1] sm:$0xff]
    %v394 = vld [vmem:[%s1 + $0x8] sm:$0xff]
    %v395 = vld [vmem:[%s1 + $0x10] sm:$0xff]
    %v396 = vld [vmem:[%s1 + $0x18] sm:$0x7]
    %s397 = scalar_lea.vmem %s1, 32
    %v398 = vld [vmem:[%s397] sm:$0xff]
    %v399 = vld [vmem:[%s397 + $0x8] sm:$0xff]
    %v400 = vld [vmem:[%s397 + $0x10] sm:$0xff]
    %v401 = vld [vmem:[%s397 + $0x18] sm:$0x7]
    %vm419 = vcmask 1046528
    %v420 = vrot.slane %v168, 1
    %v421 = vrot.slane %v169, 1
    %v422 = vsel %vm419, %v420, %v421
    %v423 = vrot.slane %v170, 1
    %v424 = vsel %vm419, %v421, %v423
    %v425 = vrot.slane %v171, 1
    %v426 = vsel %vm419, %v423, %v425
    %v427 = vrot.slane %v172, 1
    %v428 = vsel %vm419, %v425, %v427
    %v429 = vrot.slane %v173, 1
    %v430 = vsel %vm419, %v427, %v429
    %v431 = vrot.slane %v174, 1
    %v432 = vsel %vm419, %v429, %v431
    %v433 = vrot.slane %v175, 1
    %v434 = vsel %vm419, %v431, %v433
    %v435 = vrot.slane %v176, 1
    %v436 = vsel %vm419, %v433, %v435
    %v437 = vrot.slane %v177, 1
    %v438 = vsel %vm419, %v435, %v437
    %v439 = vrot.slane %v178, 1
    %v440 = vsel %vm419, %v437, %v439
    %v441 = vrot.slane %v179, 1
    %v442 = vsel %vm419, %v439, %v441
    %v443 = vrot.slane %v180, 1
    %v444 = vsel %vm419, %v441, %v443
    %v445 = vrot.slane %v181, 1
    %v446 = vsel %vm419, %v443, %v445
    %v447 = vrot.slane %v182, 1
    %v448 = vsel %vm419, %v445, %v447
    %v449 = vrot.slane %v183, 1
    %v450 = vsel %vm419, %v447, %v449
    %v451 = vrot.slane 0.0, 1
    %v452 = vsel %vm419, %v449, %v451
    %vm453 = vcmask 220160
    %v454 = vsel %vm453, %v422, 0
    %v456 = vsel %vm453, %v424, 0
    %v458 = vsel %vm453, %v426, 0
    %v460 = vsel %vm453, %v428, 0
    %v462 = vsel %vm453, %v430, 0
    %v464 = vsel %vm453, %v432, 0
    %v466 = vsel %vm453, %v434, 0
    %v468 = vsel %vm453, %v436, 0
    %v470 = vsel %vm453, %v438, 0
    %v472 = vsel %vm453, %v440, 0
    %v474 = vsel %vm453, %v442, 0
    %v476 = vsel %vm453, %v444, 0
    %v478 = vsel %vm453, %v446, 0
    %v480 = vsel %vm453, %v448, 0
    %v482 = vsel %vm453, %v450, 0
    %v484 = vsel %vm453, %v452, 0
    %vm486 = vcmask 1042432
    %v488 = vsel %vm486, %v401, 0
    %490 = vmatpush.msra.mxu0 0.0
    %491 = vmatpush.msra.mxu0 0.0
    %492 = vmatpush.msra.mxu0 0.0
    %493 = vmatpush.msra.mxu0 0.0
    %494 = vmatpush.msra.mxu0 0.0
    %495 = vmatpush.msra.mxu0 0.0
    %496 = vmatpush.msra.mxu0 0.0
    %497 = vmatpush.msra.mxu0 0.0
    %498 = vmatpush.msra.mxu0 0.0
    %499 = vmatpush.msra.mxu0 0.0
    %500 = vmatpush.msra.mxu0 0.0
    %501 = vmatpush.msra.mxu0 0.0
    %502 = vmatpush.msra.mxu0 %v488
    %503 = vmatpush.msra.mxu0 %v400
    %504 = vmatpush.msra.mxu0 %v399
    %505 = vmatpush.msra.mxu0 %v398
    %506 = vmatmul.f32.gmra.mxu0 %v454
    %v507 = vpop.f32.mrf.mxu0
    %v508 = vadd.f32 0.0, %v507
    %509 = vmatmul.f32.gmra.mxu0 %v456
    %v510 = vpop.f32.mrf.mxu0
    %v511 = vadd.f32 0.0, %v510
    %512 = vmatmul.f32.gmra.mxu0 %v458
    %v513 = vpop.f32.mrf.mxu0
    %v514 = vadd.f32 0.0, %v513
    %515 = vmatmul.f32.gmra.mxu0 %v460
    %v516 = vpop.f32.mrf.mxu0
    %v517 = vadd.f32 0.0, %v516
    %518 = vmatmul.f32.gmra.mxu0 %v462
    %v519 = vpop.f32.mrf.mxu0
    %v520 = vadd.f32 0.0, %v519
    %521 = vmatmul.f32.gmra.mxu0 %v464
    %v522 = vpop.f32.mrf.mxu0
    %v523 = vadd.f32 0.0, %v522
    %524 = vmatmul.f32.gmra.mxu0 %v466
    %v525 = vpop.f32.mrf.mxu0
    %v526 = vadd.f32 0.0, %v525
    %527 = vmatmul.f32.gmra.mxu0 %v468
    %v528 = vpop.f32.mrf.mxu0
    %v529 = vadd.f32 0.0, %v528
    %530 = vmatmul.f32.gmra.mxu0 %v470
    %v531 = vpop.f32.mrf.mxu0
    %v532 = vadd.f32 0.0, %v531
    %533 = vmatmul.f32.gmra.mxu0 %v472
    %v534 = vpop.f32.mrf.mxu0
    %v535 = vadd.f32 0.0, %v534
    %536 = vmatmul.f32.gmra.mxu0 %v474
    %v537 = vpop.f32.mrf.mxu0
    %v538 = vadd.f32 0.0, %v537
    %539 = vmatmul.f32.gmra.mxu0 %v476
    %v540 = vpop.f32.mrf.mxu0
    %v541 = vadd.f32 0.0, %v540
    %542 = vmatmul.f32.gmra.mxu0 %v478
    %v543 = vpop.f32.mrf.mxu0
    %v544 = vadd.f32 0.0, %v543
    %545 = vmatmul.f32.gmra.mxu0 %v480
    %v546 = vpop.f32.mrf.mxu0
    %v547 = vadd.f32 0.0, %v546
    %548 = vmatmul.f32.gmra.mxu0 %v482
    %v549 = vpop.f32.mrf.mxu0
    %v550 = vadd.f32 0.0, %v549
    %551 = vmatmul.f32.gmra.mxu0 %v484
    %v552 = vpop.f32.mrf.mxu0
    %v553 = vadd.f32 0.0, %v552
    %554 = vdwg.mxu0
    %v555 = vsel %vm453, %v168, 0
    %v557 = vsel %vm453, %v169, 0
    %v559 = vsel %vm453, %v170, 0
    %v561 = vsel %vm453, %v171, 0
    %v563 = vsel %vm453, %v172, 0
    %v565 = vsel %vm453, %v173, 0
    %v567 = vsel %vm453, %v174, 0
    %v569 = vsel %vm453, %v175, 0
    %v571 = vsel %vm453, %v176, 0
    %v573 = vsel %vm453, %v177, 0
    %v575 = vsel %vm453, %v178, 0
    %v577 = vsel %vm453, %v179, 0
    %v579 = vsel %vm453, %v180, 0
    %v581 = vsel %vm453, %v181, 0
    %v583 = vsel %vm453, %v182, 0
    %v585 = vsel %vm453, %v183, 0
    %v588 = vsel %vm486, %v396, 0
    %590 = vmatpush.msra.mxu0 0.0
    %591 = vmatpush.msra.mxu0 0.0
    %592 = vmatpush.msra.mxu0 0.0
    %593 = vmatpush.msra.mxu0 0.0
    %594 = vmatpush.msra.mxu0 0.0
    %595 = vmatpush.msra.mxu0 0.0
    %596 = vmatpush.msra.mxu0 0.0
    %597 = vmatpush.msra.mxu0 0.0
    %598 = vmatpush.msra.mxu0 0.0
    %599 = vmatpush.msra.mxu0 0.0
    %600 = vmatpush.msra.mxu0 0.0
    %601 = vmatpush.msra.mxu0 0.0
    %602 = vmatpush.msra.mxu0 %v588
    %603 = vmatpush.msra.mxu0 %v395
    %604 = vmatpush.msra.mxu0 %v394
    %605 = vmatpush.msra.mxu0 %v393
    %606 = vmatmul.f32.gmra.mxu0 %v555
    %v607 = vpop.f32.mrf.mxu0
    %v608 = vadd.f32 %v508, %v607
    %609 = vmatmul.f32.gmra.mxu0 %v557
    %v610 = vpop.f32.mrf.mxu0
    %v611 = vadd.f32 %v511, %v610
    %612 = vmatmul.f32.gmra.mxu0 %v559
    %v613 = vpop.f32.mrf.mxu0
    %v614 = vadd.f32 %v514, %v613
    %615 = vmatmul.f32.gmra.mxu0 %v561
    %v616 = vpop.f32.mrf.mxu0
    %v617 = vadd.f32 %v517, %v616
    %618 = vmatmul.f32.gmra.mxu0 %v563
    %v619 = vpop.f32.mrf.mxu0
    %v620 = vadd.f32 %v520, %v619
    %621 = vmatmul.f32.gmra.mxu0 %v565
    %v622 = vpop.f32.mrf.mxu0
    %v623 = vadd.f32 %v523, %v622
    %624 = vmatmul.f32.gmra.mxu0 %v567
    %v625 = vpop.f32.mrf.mxu0
    %v626 = vadd.f32 %v526, %v625
    %627 = vmatmul.f32.gmra.mxu0 %v569
    %v628 = vpop.f32.mrf.mxu0
    %v629 = vadd.f32 %v529, %v628
    %630 = vmatmul.f32.gmra.mxu0 %v571
    %v631 = vpop.f32.mrf.mxu0
    %v632 = vadd.f32 %v532, %v631
    %633 = vmatmul.f32.gmra.mxu0 %v573
    %v634 = vpop.f32.mrf.mxu0
    %v635 = vadd.f32 %v535, %v634
    %636 = vmatmul.f32.gmra.mxu0 %v575
    %v637 = vpop.f32.mrf.mxu0
    %v638 = vadd.f32 %v538, %v637
    %639 = vmatmul.f32.gmra.mxu0 %v577
    %v640 = vpop.f32.mrf.mxu0
    %v641 = vadd.f32 %v541, %v640
    %642 = vmatmul.f32.gmra.mxu0 %v579
    %v643 = vpop.f32.mrf.mxu0
    %v644 = vadd.f32 %v544, %v643
    %645 = vmatmul.f32.gmra.mxu0 %v581
    %v646 = vpop.f32.mrf.mxu0
    %v647 = vadd.f32 %v547, %v646
    %648 = vmatmul.f32.gmra.mxu0 %v583
    %v649 = vpop.f32.mrf.mxu0
    %v650 = vadd.f32 %v550, %v649
    %651 = vmatmul.f32.gmra.mxu0 %v585
    %v652 = vpop.f32.mrf.mxu0
    %v653 = vadd.f32 %v553, %v652
    %654 = vdwg.mxu0
    %s655 = scalar_lea.vmem %s1, 64
    %v656 = vld [vmem:[%s655] sm:$0xff]
    %v657 = vld [vmem:[%s655 + $0x8] sm:$0xff]
    %v658 = vld [vmem:[%s655 + $0x10] sm:$0xff]
    %v659 = vld [vmem:[%s655 + $0x18] sm:$0x7]
    %vm660 = vcmask 1045504
    %v661 = vrot.slane %v168, 2
    %v662 = vrot.slane %v169, 2
    %v663 = vsel %vm660, %v661, %v662
    %v664 = vrot.slane %v170, 2
    %v665 = vsel %vm660, %v662, %v664
    %v666 = vrot.slane %v171, 2
    %v667 = vsel %vm660, %v664, %v666
    %v668 = vrot.slane %v172, 2
    %v669 = vsel %vm660, %v666, %v668
    %v670 = vrot.slane %v173, 2
    %v671 = vsel %vm660, %v668, %v670
    %v672 = vrot.slane %v174, 2
    %v673 = vsel %vm660, %v670, %v672
    %v674 = vrot.slane %v175, 2
    %v675 = vsel %vm660, %v672, %v674
    %v676 = vrot.slane %v176, 2
    %v677 = vsel %vm660, %v674, %v676
    %v678 = vrot.slane %v177, 2
    %v679 = vsel %vm660, %v676, %v678
    %v680 = vrot.slane %v178, 2
    %v681 = vsel %vm660, %v678, %v680
    %v682 = vrot.slane %v179, 2
    %v683 = vsel %vm660, %v680, %v682
    %v684 = vrot.slane %v180, 2
    %v685 = vsel %vm660, %v682, %v684
    %v686 = vrot.slane %v181, 2
    %v687 = vsel %vm660, %v684, %v686
    %v688 = vrot.slane %v182, 2
    %v689 = vsel %vm660, %v686, %v688
    %v690 = vrot.slane %v183, 2
    %v691 = vsel %vm660, %v688, %v690
    %v692 = vrot.slane 0.0, 2
    %v693 = vsel %vm660, %v690, %v692
    %v694 = vsel %vm453, %v663, 0
    %v696 = vsel %vm453, %v665, 0
    %v698 = vsel %vm453, %v667, 0
    %v700 = vsel %vm453, %v669, 0
    %v702 = vsel %vm453, %v671, 0
    %v704 = vsel %vm453, %v673, 0
    %v706 = vsel %vm453, %v675, 0
    %v708 = vsel %vm453, %v677, 0
    %v710 = vsel %vm453, %v679, 0
    %v712 = vsel %vm453, %v681, 0
    %v714 = vsel %vm453, %v683, 0
    %v716 = vsel %vm453, %v685, 0
    %v718 = vsel %vm453, %v687, 0
    %v720 = vsel %vm453, %v689, 0
    %v722 = vsel %vm453, %v691, 0
    %v724 = vsel %vm453, %v693, 0
    %v727 = vsel %vm486, %v659, 0
    %729 = vmatpush.msra.mxu0 0.0
    %730 = vmatpush.msra.mxu0 0.0
    %731 = vmatpush.msra.mxu0 0.0
    %732 = vmatpush.msra.mxu0 0.0
    %733 = vmatpush.msra.mxu0 0.0
    %734 = vmatpush.msra.mxu0 0.0
    %735 = vmatpush.msra.mxu0 0.0
    %736 = vmatpush.msra.mxu0 0.0
    %737 = vmatpush.msra.mxu0 0.0
    %738 = vmatpush.msra.mxu0 0.0
    %739 = vmatpush.msra.mxu0 0.0
    %740 = vmatpush.msra.mxu0 0.0
    %741 = vmatpush.msra.mxu0 %v727
    %742 = vmatpush.msra.mxu0 %v658
    %743 = vmatpush.msra.mxu0 %v657
    %744 = vmatpush.msra.mxu0 %v656
    %745 = vmatmul.f32.gmra.mxu0 %v694
    %v746 = vpop.f32.mrf.mxu0
    %v747 = vadd.f32 0.0, %v746
    %748 = vmatmul.f32.gmra.mxu0 %v696
    %v749 = vpop.f32.mrf.mxu0
    %v750 = vadd.f32 0.0, %v749
    %751 = vmatmul.f32.gmra.mxu0 %v698
    %v752 = vpop.f32.mrf.mxu0
    %v753 = vadd.f32 0.0, %v752
    %754 = vmatmul.f32.gmra.mxu0 %v700
    %v755 = vpop.f32.mrf.mxu0
    %v756 = vadd.f32 0.0, %v755
    %757 = vmatmul.f32.gmra.mxu0 %v702
    %v758 = vpop.f32.mrf.mxu0
    %v759 = vadd.f32 0.0, %v758
    %760 = vmatmul.f32.gmra.mxu0 %v704
    %v761 = vpop.f32.mrf.mxu0
    %v762 = vadd.f32 0.0, %v761
    %763 = vmatmul.f32.gmra.mxu0 %v706
    %v764 = vpop.f32.mrf.mxu0
    %v765 = vadd.f32 0.0, %v764
    %766 = vmatmul.f32.gmra.mxu0 %v708
    %v767 = vpop.f32.mrf.mxu0
    %v768 = vadd.f32 0.0, %v767
    %769 = vmatmul.f32.gmra.mxu0 %v710
    %v770 = vpop.f32.mrf.mxu0
    %v771 = vadd.f32 0.0, %v770
    %772 = vmatmul.f32.gmra.mxu0 %v712
    %v773 = vpop.f32.mrf.mxu0
    %v774 = vadd.f32 0.0, %v773
    %775 = vmatmul.f32.gmra.mxu0 %v714
    %v776 = vpop.f32.mrf.mxu0
    %v777 = vadd.f32 0.0, %v776
    %778 = vmatmul.f32.gmra.mxu0 %v716
    %v779 = vpop.f32.mrf.mxu0
    %v780 = vadd.f32 0.0, %v779
    %781 = vmatmul.f32.gmra.mxu0 %v718
    %v782 = vpop.f32.mrf.mxu0
    %v783 = vadd.f32 0.0, %v782
    %784 = vmatmul.f32.gmra.mxu0 %v720
    %v785 = vpop.f32.mrf.mxu0
    %v786 = vadd.f32 0.0, %v785
    %787 = vmatmul.f32.gmra.mxu0 %v722
    %v788 = vpop.f32.mrf.mxu0
    %v789 = vadd.f32 0.0, %v788
    %790 = vmatmul.f32.gmra.mxu0 %v724
    %v791 = vpop.f32.mrf.mxu0
    %v792 = vadd.f32 0.0, %v791
    %793 = vdwg.mxu0
    %v794 = vadd.f32 %v608, %v747
    %v795 = vadd.f32 %v611, %v750
    %v796 = vadd.f32 %v614, %v753
    %v797 = vadd.f32 %v617, %v756
    %v798 = vadd.f32 %v620, %v759
    %v799 = vadd.f32 %v623, %v762
    %v800 = vadd.f32 %v626, %v765
    %v801 = vadd.f32 %v629, %v768
    %v802 = vadd.f32 %v632, %v771
    %v803 = vadd.f32 %v635, %v774
    %v804 = vadd.f32 %v638, %v777
    %v805 = vadd.f32 %v641, %v780
    %v806 = vadd.f32 %v644, %v783
    %v807 = vadd.f32 %v647, %v786
    %v808 = vadd.f32 %v650, %v789
    %v809 = vadd.f32 %v653, %v792
    %v810 = vld [vmem:[%s2] sm:$0x1]
    %v812 = vperm.slane %v810, 0
    %v814 = vadd.f32 %v794, %v812
    %v815 = vadd.f32 %v795, %v812
    %v816 = vadd.f32 %v796, %v812
    %v817 = vadd.f32 %v797, %v812
    %v818 = vadd.f32 %v798, %v812
    %v819 = vadd.f32 %v799, %v812
    %v820 = vadd.f32 %v800, %v812
    %v821 = vadd.f32 %v801, %v812
    %v822 = vadd.f32 %v802, %v812
    %v823 = vadd.f32 %v803, %v812
    %v824 = vadd.f32 %v804, %v812
    %v825 = vadd.f32 %v805, %v812
    %v826 = vadd.f32 %v806, %v812
    %v827 = vadd.f32 %v807, %v812
    %v828 = vadd.f32 %v808, %v812
    %v829 = vadd.f32 %v809, %v812
    %v830 = vmax.f32 %v814, 0.0
    %v831 = vmax.f32 %v815, 0.0
    %v832 = vmax.f32 %v816, 0.0
    %v833 = vmax.f32 %v817, 0.0
    %v834 = vmax.f32 %v818, 0.0
    %v835 = vmax.f32 %v819, 0.0
    %v836 = vmax.f32 %v820, 0.0
    %v837 = vmax.f32 %v821, 0.0
    %v838 = vmax.f32 %v822, 0.0
    %v839 = vmax.f32 %v823, 0.0
    %v840 = vmax.f32 %v824, 0.0
    %v841 = vmax.f32 %v825, 0.0
    %v842 = vmax.f32 %v826, 0.0
    %v843 = vmax.f32 %v827, 0.0
    %v844 = vmax.f32 %v828, 0.0
    %v845 = vmax.f32 %v829, 0.0
    %vm846 = vcmp.lt.s32.totalorder %v377, 30
    %vm847 = vcmp.lt.s32.totalorder %v378, 30
    %vm848 = vcmp.lt.s32.totalorder %v379, 30
    %vm849 = vcmp.lt.s32.totalorder %v380, 30
    %vm850 = vcmp.lt.s32.totalorder %v381, 30
    %vm851 = vcmp.lt.s32.totalorder %v382, 30
    %vm852 = vcmp.lt.s32.totalorder %v383, 30
    %vm853 = vcmp.lt.s32.totalorder %v384, 30
    %vm854 = vcmp.lt.s32.totalorder %v385, 30
    %vm855 = vcmp.lt.s32.totalorder %v386, 30
    %vm856 = vcmp.lt.s32.totalorder %v387, 30
    %vm857 = vcmp.lt.s32.totalorder %v388, 30
    %vm858 = vcmp.lt.s32.totalorder %v389, 30
    %vm859 = vcmp.lt.s32.totalorder %v390, 30
    %vm860 = vcmp.lt.s32.totalorder %v391, 30
    %vm861 = vcmp.lt.s32.totalorder %v392, 30
    %v862 = vsel %vm846, %v830, 0.0
    %v863 = vsel %vm847, %v831, 0.0
    %v864 = vsel %vm848, %v832, 0.0
    %v865 = vsel %vm849, %v833, 0.0
    %v866 = vsel %vm850, %v834, 0.0
    %v867 = vsel %vm851, %v835, 0.0
    %v868 = vsel %vm852, %v836, 0.0
    %v869 = vsel %vm853, %v837, 0.0
    %v870 = vsel %vm854, %v838, 0.0
    %v871 = vsel %vm855, %v839, 0.0
    %v872 = vsel %vm856, %v840, 0.0
    %v873 = vsel %vm857, %v841, 0.0
    %v874 = vsel %vm858, %v842, 0.0
    %v875 = vsel %vm859, %v843, 0.0
    %v876 = vsel %vm860, %v844, 0.0
    %v877 = vsel %vm861, %v845, 0.0
    %vm878 = vcmask 261120
    %v879 = vsel %vm878, %v862, -inf
    %v880 = vsel %vm878, %v863, -inf
    %v881 = vmax.f32 %v879, %v880
    %v882 = vsel %vm878, %v864, -inf
    %v883 = vmax.f32 %v881, %v882
    %v884 = vsel %vm878, %v865, -inf
    %v885 = vmax.f32 %v883, %v884
    %v886 = vrot.slane %v885, 4
    %v887 = vmax.f32 %v885, %v886
    %v888 = vrot.slane %v887, 2
    %v889 = vmax.f32 %v887, %v888
    %v890 = vrot.slane %v889, 1
    %v891 = vmax.f32 %v889, %v890
    %v892 = vsel %vm878, %v866, -inf
    %v893 = vsel %vm878, %v867, -inf
    %v894 = vmax.f32 %v892, %v893
    %v895 = vsel %vm878, %v868, -inf
    %v896 = vmax.f32 %v894, %v895
    %v897 = vsel %vm878, %v869, -inf
    %v898 = vmax.f32 %v896, %v897
    %v899 = vrot.slane %v898, 4
    %v900 = vmax.f32 %v898, %v899
    %v901 = vrot.slane %v900, 2
    %v902 = vmax.f32 %v900, %v901
    %v903 = vrot.slane %v902, 1
    %v904 = vmax.f32 %v902, %v903
    %v905 = vsel %vm878, %v870, -inf
    %v906 = vsel %vm878, %v871, -inf
    %v907 = vmax.f32 %v905, %v906
    %v908 = vsel %vm878, %v872, -inf
    %v909 = vmax.f32 %v907, %v908
    %v910 = vsel %vm878, %v873, -inf
    %v911 = vmax.f32 %v909, %v910
    %v912 = vrot.slane %v911, 4
    %v913 = vmax.f32 %v911, %v912
    %v914 = vrot.slane %v913, 2
    %v915 = vmax.f32 %v913, %v914
    %v916 = vrot.slane %v915, 1
    %v917 = vmax.f32 %v915, %v916
    %v918 = vsel %vm878, %v874, -inf
    %v919 = vsel %vm878, %v875, -inf
    %v920 = vmax.f32 %v918, %v919
    %v921 = vsel %vm878, %v876, -inf
    %v922 = vmax.f32 %v920, %v921
    %v923 = vsel %vm878, %v877, -inf
    %v924 = vmax.f32 %v922, %v923
    %v925 = vrot.slane %v924, 4
    %v926 = vmax.f32 %v924, %v925
    %v927 = vrot.slane %v926, 2
    %v928 = vmax.f32 %v926, %v927
    %v929 = vrot.slane %v928, 1
    %v930 = vmax.f32 %v928, %v929
    %v931 = vld [vmem:[#allocation2] sm:$0xff]
    %v932 = vld [vmem:[#allocation2 + $0x8] sm:$0xff]
    %v933 = vld [vmem:[#allocation2 + $0x10] sm:$0xff]
    %v934 = vld [vmem:[#allocation2 + $0x18] sm:$0x7]
    %s935 = scalar_lea.vmem [#allocation2], 32
    %v936 = vld [vmem:[%s935] sm:$0xff]
    %v937 = vld [vmem:[%s935 + $0x8] sm:$0xff]
    %v938 = vld [vmem:[%s935 + $0x10] sm:$0xff]
    %v939 = vld [vmem:[%s935 + $0x18] sm:$0x7]
    %v941 = vsel %vm486, %v939, 0
    %943 = vmatpush.msra.mxu0 0.0
    %944 = vmatpush.msra.mxu0 0.0
    %945 = vmatpush.msra.mxu0 0.0
    %946 = vmatpush.msra.mxu0 0.0
    %947 = vmatpush.msra.mxu0 0.0
    %948 = vmatpush.msra.mxu0 0.0
    %949 = vmatpush.msra.mxu0 0.0
    %950 = vmatpush.msra.mxu0 0.0
    %951 = vmatpush.msra.mxu0 0.0
    %952 = vmatpush.msra.mxu0 0.0
    %953 = vmatpush.msra.mxu0 0.0
    %954 = vmatpush.msra.mxu0 0.0
    %955 = vmatpush.msra.mxu0 %v941
    %956 = vmatpush.msra.mxu0 %v938
    %957 = vmatpush.msra.mxu0 %v937
    %958 = vmatpush.msra.mxu0 %v936
    %959 = vmatmul.f32.gmra.mxu0 %v454
    %v960 = vpop.f32.mrf.mxu0
    %v961 = vadd.f32 0.0, %v960
    %962 = vmatmul.f32.gmra.mxu0 %v456
    %v963 = vpop.f32.mrf.mxu0
    %v964 = vadd.f32 0.0, %v963
    %965 = vmatmul.f32.gmra.mxu0 %v458
    %v966 = vpop.f32.mrf.mxu0
    %v967 = vadd.f32 0.0, %v966
    %968 = vmatmul.f32.gmra.mxu0 %v460
    %v969 = vpop.f32.mrf.mxu0
    %v970 = vadd.f32 0.0, %v969
    %971 = vmatmul.f32.gmra.mxu0 %v462
    %v972 = vpop.f32.mrf.mxu0
    %v973 = vadd.f32 0.0, %v972
    %974 = vmatmul.f32.gmra.mxu0 %v464
    %v975 = vpop.f32.mrf.mxu0
    %v976 = vadd.f32 0.0, %v975
    %977 = vmatmul.f32.gmra.mxu0 %v466
    %v978 = vpop.f32.mrf.mxu0
    %v979 = vadd.f32 0.0, %v978
    %980 = vmatmul.f32.gmra.mxu0 %v468
    %v981 = vpop.f32.mrf.mxu0
    %v982 = vadd.f32 0.0, %v981
    %983 = vmatmul.f32.gmra.mxu0 %v470
    %v984 = vpop.f32.mrf.mxu0
    %v985 = vadd.f32 0.0, %v984
    %986 = vmatmul.f32.gmra.mxu0 %v472
    %v987 = vpop.f32.mrf.mxu0
    %v988 = vadd.f32 0.0, %v987
    %989 = vmatmul.f32.gmra.mxu0 %v474
    %v990 = vpop.f32.mrf.mxu0
    %v991 = vadd.f32 0.0, %v990
    %992 = vmatmul.f32.gmra.mxu0 %v476
    %v993 = vpop.f32.mrf.mxu0
    %v994 = vadd.f32 0.0, %v993
    %995 = vmatmul.f32.gmra.mxu0 %v478
    %v996 = vpop.f32.mrf.mxu0
    %v997 = vadd.f32 0.0, %v996
    %998 = vmatmul.f32.gmra.mxu0 %v480
    %v999 = vpop.f32.mrf.mxu0
    %v1000 = vadd.f32 0.0, %v999
    %1001 = vmatmul.f32.gmra.mxu0 %v482
    %v1002 = vpop.f32.mrf.mxu0
    %v1003 = vadd.f32 0.0, %v1002
    %1004 = vmatmul.f32.gmra.mxu0 %v484
    %v1005 = vpop.f32.mrf.mxu0
    %v1006 = vadd.f32 0.0, %v1005
    %1007 = vdwg.mxu0
    %v1009 = vsel %vm486, %v934, 0
    %1011 = vmatpush.msra.mxu0 0.0
    %1012 = vmatpush.msra.mxu0 0.0
    %1013 = vmatpush.msra.mxu0 0.0
    %1014 = vmatpush.msra.mxu0 0.0
    %1015 = vmatpush.msra.mxu0 0.0
    %1016 = vmatpush.msra.mxu0 0.0
    %1017 = vmatpush.msra.mxu0 0.0
    %1018 = vmatpush.msra.mxu0 0.0
    %1019 = vmatpush.msra.mxu0 0.0
    %1020 = vmatpush.msra.mxu0 0.0
    %1021 = vmatpush.msra.mxu0 0.0
    %1022 = vmatpush.msra.mxu0 0.0
    %1023 = vmatpush.msra.mxu0 %v1009
    %1024 = vmatpush.msra.mxu0 %v933
    %1025 = vmatpush.msra.mxu0 %v932
    %1026 = vmatpush.msra.mxu0 %v931
    %1027 = vmatmul.f32.gmra.mxu0 %v555
    %v1028 = vpop.f32.mrf.mxu0
    %v1029 = vadd.f32 %v961, %v1028
    %1030 = vmatmul.f32.gmra.mxu0 %v557
    %v1031 = vpop.f32.mrf.mxu0
    %v1032 = vadd.f32 %v964, %v1031
    %1033 = vmatmul.f32.gmra.mxu0 %v559
    %v1034 = vpop.f32.mrf.mxu0
    %v1035 = vadd.f32 %v967, %v1034
    %1036 = vmatmul.f32.gmra.mxu0 %v561
    %v1037 = vpop.f32.mrf.mxu0
    %v1038 = vadd.f32 %v970, %v1037
    %1039 = vmatmul.f32.gmra.mxu0 %v563
    %v1040 = vpop.f32.mrf.mxu0
    %v1041 = vadd.f32 %v973, %v1040
    %1042 = vmatmul.f32.gmra.mxu0 %v565
    %v1043 = vpop.f32.mrf.mxu0
    %v1044 = vadd.f32 %v976, %v1043
    %1045 = vmatmul.f32.gmra.mxu0 %v567
    %v1046 = vpop.f32.mrf.mxu0
    %v1047 = vadd.f32 %v979, %v1046
    %1048 = vmatmul.f32.gmra.mxu0 %v569
    %v1049 = vpop.f32.mrf.mxu0
    %v1050 = vadd.f32 %v982, %v1049
    %1051 = vmatmul.f32.gmra.mxu0 %v571
    %v1052 = vpop.f32.mrf.mxu0
    %v1053 = vadd.f32 %v985, %v1052
    %1054 = vmatmul.f32.gmra.mxu0 %v573
    %v1055 = vpop.f32.mrf.mxu0
    %v1056 = vadd.f32 %v988, %v1055
    %1057 = vmatmul.f32.gmra.mxu0 %v575
    %v1058 = vpop.f32.mrf.mxu0
    %v1059 = vadd.f32 %v991, %v1058
    %1060 = vmatmul.f32.gmra.mxu0 %v577
    %v1061 = vpop.f32.mrf.mxu0
    %v1062 = vadd.f32 %v994, %v1061
    %1063 = vmatmul.f32.gmra.mxu0 %v579
    %v1064 = vpop.f32.mrf.mxu0
    %v1065 = vadd.f32 %v997, %v1064
    %1066 = vmatmul.f32.gmra.mxu0 %v581
    %v1067 = vpop.f32.mrf.mxu0
    %v1068 = vadd.f32 %v1000, %v1067
    %1069 = vmatmul.f32.gmra.mxu0 %v583
    %v1070 = vpop.f32.mrf.mxu0
    %v1071 = vadd.f32 %v1003, %v1070
    %1072 = vmatmul.f32.gmra.mxu0 %v585
    %v1073 = vpop.f32.mrf.mxu0
    %v1074 = vadd.f32 %v1006, %v1073
    %1075 = vdwg.mxu0
    %s1076 = scalar_lea.vmem [#allocation2], 64
    %v1077 = vld [vmem:[%s1076] sm:$0xff]
    %v1078 = vld [vmem:[%s1076 + $0x8] sm:$0xff]
    %v1079 = vld [vmem:[%s1076 + $0x10] sm:$0xff]
    %v1080 = vld [vmem:[%s1076 + $0x18] sm:$0x7]
    %v1082 = vsel %vm486, %v1080, 0
    %1084 = vmatpush.msra.mxu0 0.0
    %1085 = vmatpush.msra.mxu0 0.0
    %1086 = vmatpush.msra.mxu0 0.0
    %1087 = vmatpush.msra.mxu0 0.0
    %1088 = vmatpush.msra.mxu0 0.0
    %1089 = vmatpush.msra.mxu0 0.0
    %1090 = vmatpush.msra.mxu0 0.0
    %1091 = vmatpush.msra.mxu0 0.0
    %1092 = vmatpush.msra.mxu0 0.0
    %1093 = vmatpush.msra.mxu0 0.0
    %1094 = vmatpush.msra.mxu0 0.0
    %1095 = vmatpush.msra.mxu0 0.0
    %1096 = vmatpush.msra.mxu0 %v1082
    %1097 = vmatpush.msra.mxu0 %v1079
    %1098 = vmatpush.msra.mxu0 %v1078
    %1099 = vmatpush.msra.mxu0 %v1077
    %1100 = vmatmul.f32.gmra.mxu0 %v694
    %v1101 = vpop.f32.mrf.mxu0
    %v1102 = vadd.f32 0.0, %v1101
    %1103 = vmatmul.f32.gmra.mxu0 %v696
    %v1104 = vpop.f32.mrf.mxu0
    %v1105 = vadd.f32 0.0, %v1104
    %1106 = vmatmul.f32.gmra.mxu0 %v698
    %v1107 = vpop.f32.mrf.mxu0
    %v1108 = vadd.f32 0.0, %v1107
    %1109 = vmatmul.f32.gmra.mxu0 %v700
    %v1110 = vpop.f32.mrf.mxu0
    %v1111 = vadd.f32 0.0, %v1110
    %1112 = vmatmul.f32.gmra.mxu0 %v702
    %v1113 = vpop.f32.mrf.mxu0
    %v1114 = vadd.f32 0.0, %v1113
    %1115 = vmatmul.f32.gmra.mxu0 %v704
    %v1116 = vpop.f32.mrf.mxu0
    %v1117 = vadd.f32 0.0, %v1116
    %1118 = vmatmul.f32.gmra.mxu0 %v706
    %v1119 = vpop.f32.mrf.mxu0
    %v1120 = vadd.f32 0.0, %v1119
    %1121 = vmatmul.f32.gmra.mxu0 %v708
    %v1122 = vpop.f32.mrf.mxu0
    %v1123 = vadd.f32 0.0, %v1122
    %1124 = vmatmul.f32.gmra.mxu0 %v710
    %v1125 = vpop.f32.mrf.mxu0
    %v1126 = vadd.f32 0.0, %v1125
    %1127 = vmatmul.f32.gmra.mxu0 %v712
    %v1128 = vpop.f32.mrf.mxu0
    %v1129 = vadd.f32 0.0, %v1128
    %1130 = vmatmul.f32.gmra.mxu0 %v714
    %v1131 = vpop.f32.mrf.mxu0
    %v1132 = vadd.f32 0.0, %v1131
    %1133 = vmatmul.f32.gmra.mxu0 %v716
    %v1134 = vpop.f32.mrf.mxu0
    %v1135 = vadd.f32 0.0, %v1134
    %1136 = vmatmul.f32.gmra.mxu0 %v718
    %v1137 = vpop.f32.mrf.mxu0
    %v1138 = vadd.f32 0.0, %v1137
    %1139 = vmatmul.f32.gmra.mxu0 %v720
    %v1140 = vpop.f32.mrf.mxu0
    %v1141 = vadd.f32 0.0, %v1140
    %1142 = vmatmul.f32.gmra.mxu0 %v722
    %v1143 = vpop.f32.mrf.mxu0
    %v1144 = vadd.f32 0.0, %v1143
    %1145 = vmatmul.f32.gmra.mxu0 %v724
    %v1146 = vpop.f32.mrf.mxu0
    %v1147 = vadd.f32 0.0, %v1146
    %1148 = vdwg.mxu0
    %v1149 = vadd.f32 %v1029, %v1102
    %v1150 = vadd.f32 %v1032, %v1105
    %v1151 = vadd.f32 %v1035, %v1108
    %v1152 = vadd.f32 %v1038, %v1111
    %v1153 = vadd.f32 %v1041, %v1114
    %v1154 = vadd.f32 %v1044, %v1117
    %v1155 = vadd.f32 %v1047, %v1120
    %v1156 = vadd.f32 %v1050, %v1123
    %v1157 = vadd.f32 %v1053, %v1126
    %v1158 = vadd.f32 %v1056, %v1129
    %v1159 = vadd.f32 %v1059, %v1132
    %v1160 = vadd.f32 %v1062, %v1135
    %v1161 = vadd.f32 %v1065, %v1138
    %v1162 = vadd.f32 %v1068, %v1141
    %v1163 = vadd.f32 %v1071, %v1144
    %v1164 = vadd.f32 %v1074, %v1147
    %s1165 = scalar_lea.vmem [#allocation2], 96
    %v1166 = vld [vmem:[%s1165] sm:$0xff]
    %v1167 = vld [vmem:[%s1165 + $0x8] sm:$0xff]
    %v1168 = vld [vmem:[%s1165 + $0x10] sm:$0xff]
    %v1169 = vld [vmem:[%s1165 + $0x18] sm:$0x7]
    %vm1170 = vcmask 1044480
    %v1171 = vrot.slane %v168, 3
    %v1172 = vrot.slane %v169, 3
    %v1173 = vsel %vm1170, %v1171, %v1172
    %v1174 = vrot.slane %v170, 3
    %v1175 = vsel %vm1170, %v1172, %v1174
    %v1176 = vrot.slane %v171, 3
    %v1177 = vsel %vm1170, %v1174, %v1176
    %v1178 = vrot.slane %v172, 3
    %v1179 = vsel %vm1170, %v1176, %v1178
    %v1180 = vrot.slane %v173, 3
    %v1181 = vsel %vm1170, %v1178, %v1180
    %v1182 = vrot.slane %v174, 3
    %v1183 = vsel %vm1170, %v1180, %v1182
    %v1184 = vrot.slane %v175, 3
    %v1185 = vsel %vm1170, %v1182, %v1184
    %v1186 = vrot.slane %v176, 3
    %v1187 = vsel %vm1170, %v1184, %v1186
    %v1188 = vrot.slane %v177, 3
    %v1189 = vsel %vm1170, %v1186, %v1188
    %v1190 = vrot.slane %v178, 3
    %v1191 = vsel %vm1170, %v1188, %v1190
    %v1192 = vrot.slane %v179, 3
    %v1193 = vsel %vm1170, %v1190, %v1192
    %v1194 = vrot.slane %v180, 3
    %v1195 = vsel %vm1170, %v1192, %v1194
    %v1196 = vrot.slane %v181, 3
    %v1197 = vsel %vm1170, %v1194, %v1196
    %v1198 = vrot.slane %v182, 3
    %v1199 = vsel %vm1170, %v1196, %v1198
    %v1200 = vrot.slane %v183, 3
    %v1201 = vsel %vm1170, %v1198, %v1200
    %v1202 = vrot.slane 0.0, 3
    %v1203 = vsel %vm1170, %v1200, %v1202
    %v1204 = vsel %vm453, %v1173, 0
    %v1206 = vsel %vm453, %v1175, 0
    %v1208 = vsel %vm453, %v1177, 0
    %v1210 = vsel %vm453, %v1179, 0
    %v1212 = vsel %vm453, %v1181, 0
    %v1214 = vsel %vm453, %v1183, 0
    %v1216 = vsel %vm453, %v1185, 0
    %v1218 = vsel %vm453, %v1187, 0
    %v1220 = vsel %vm453, %v1189, 0
    %v1222 = vsel %vm453, %v1191, 0
    %v1224 = vsel %vm453, %v1193, 0
    %v1226 = vsel %vm453, %v1195, 0
    %v1228 = vsel %vm453, %v1197, 0
    %v1230 = vsel %vm453, %v1199, 0
    %v1232 = vsel %vm453, %v1201, 0
    %v1234 = vsel %vm453, %v1203, 0
    %v1237 = vsel %vm486, %v1169, 0
    %1239 = vmatpush.msra.mxu0 0.0
    %1240 = vmatpush.msra.mxu0 0.0
    %1241 = vmatpush.msra.mxu0 0.0
    %1242 = vmatpush.msra.mxu0 0.0
    %1243 = vmatpush.msra.mxu0 0.0
    %1244 = vmatpush.msra.mxu0 0.0
    %1245 = vmatpush.msra.mxu0 0.0
    %1246 = vmatpush.msra.mxu0 0.0
    %1247 = vmatpush.msra.mxu0 0.0
    %1248 = vmatpush.msra.mxu0 0.0
    %1249 = vmatpush.msra.mxu0 0.0
    %1250 = vmatpush.msra.mxu0 0.0
    %1251 = vmatpush.msra.mxu0 %v1237
    %1252 = vmatpush.msra.mxu0 %v1168
    %1253 = vmatpush.msra.mxu0 %v1167
    %1254 = vmatpush.msra.mxu0 %v1166
    %1255 = vmatmul.f32.gmra.mxu0 %v1204
    %v1256 = vpop.f32.mrf.mxu0
    %v1257 = vadd.f32 0.0, %v1256
    %1258 = vmatmul.f32.gmra.mxu0 %v1206
    %v1259 = vpop.f32.mrf.mxu0
    %v1260 = vadd.f32 0.0, %v1259
    %1261 = vmatmul.f32.gmra.mxu0 %v1208
    %v1262 = vpop.f32.mrf.mxu0
    %v1263 = vadd.f32 0.0, %v1262
    %1264 = vmatmul.f32.gmra.mxu0 %v1210
    %v1265 = vpop.f32.mrf.mxu0
    %v1266 = vadd.f32 0.0, %v1265
    %1267 = vmatmul.f32.gmra.mxu0 %v1212
    %v1268 = vpop.f32.mrf.mxu0
    %v1269 = vadd.f32 0.0, %v1268
    %1270 = vmatmul.f32.gmra.mxu0 %v1214
    %v1271 = vpop.f32.mrf.mxu0
    %v1272 = vadd.f32 0.0, %v1271
    %1273 = vmatmul.f32.gmra.mxu0 %v1216
    %v1274 = vpop.f32.mrf.mxu0
    %v1275 = vadd.f32 0.0, %v1274
    %1276 = vmatmul.f32.gmra.mxu0 %v1218
    %v1277 = vpop.f32.mrf.mxu0
    %v1278 = vadd.f32 0.0, %v1277
    %1279 = vmatmul.f32.gmra.mxu0 %v1220
    %v1280 = vpop.f32.mrf.mxu0
    %v1281 = vadd.f32 0.0, %v1280
    %1282 = vmatmul.f32.gmra.mxu0 %v1222
    %v1283 = vpop.f32.mrf.mxu0
    %v1284 = vadd.f32 0.0, %v1283
    %1285 = vmatmul.f32.gmra.mxu0 %v1224
    %v1286 = vpop.f32.mrf.mxu0
    %v1287 = vadd.f32 0.0, %v1286
    %1288 = vmatmul.f32.gmra.mxu0 %v1226
    %v1289 = vpop.f32.mrf.mxu0
    %v1290 = vadd.f32 0.0, %v1289
    %1291 = vmatmul.f32.gmra.mxu0 %v1228
    %v1292 = vpop.f32.mrf.mxu0
    %v1293 = vadd.f32 0.0, %v1292
    %1294 = vmatmul.f32.gmra.mxu0 %v1230
    %v1295 = vpop.f32.mrf.mxu0
    %v1296 = vadd.f32 0.0, %v1295
    %1297 = vmatmul.f32.gmra.mxu0 %v1232
    %v1298 = vpop.f32.mrf.mxu0
    %v1299 = vadd.f32 0.0, %v1298
    %1300 = vmatmul.f32.gmra.mxu0 %v1234
    %v1301 = vpop.f32.mrf.mxu0
    %v1302 = vadd.f32 0.0, %v1301
    %1303 = vdwg.mxu0
    %v1304 = vadd.f32 %v1149, %v1257
    %v1305 = vadd.f32 %v1150, %v1260
    %v1306 = vadd.f32 %v1151, %v1263
    %v1307 = vadd.f32 %v1152, %v1266
    %v1308 = vadd.f32 %v1153, %v1269
    %v1309 = vadd.f32 %v1154, %v1272
    %v1310 = vadd.f32 %v1155, %v1275
    %v1311 = vadd.f32 %v1156, %v1278
    %v1312 = vadd.f32 %v1157, %v1281
    %v1313 = vadd.f32 %v1158, %v1284
    %v1314 = vadd.f32 %v1159, %v1287
    %v1315 = vadd.f32 %v1160, %v1290
    %v1316 = vadd.f32 %v1161, %v1293
    %v1317 = vadd.f32 %v1162, %v1296
    %v1318 = vadd.f32 %v1163, %v1299
    %v1319 = vadd.f32 %v1164, %v1302
    %s1320 = scalar_lea.vmem [#allocation2], 128
    %v1321 = vld [vmem:[%s1320] sm:$0xff]
    %v1322 = vld [vmem:[%s1320 + $0x8] sm:$0xff]
    %v1323 = vld [vmem:[%s1320 + $0x10] sm:$0xff]
    %v1324 = vld [vmem:[%s1320 + $0x18] sm:$0x7]
    %vm1325 = vcmask 1043456
    %v1326 = vrot.slane %v168, 4
    %v1327 = vrot.slane %v169, 4
    %v1328 = vsel %vm1325, %v1326, %v1327
    %v1329 = vrot.slane %v170, 4
    %v1330 = vsel %vm1325, %v1327, %v1329
    %v1331 = vrot.slane %v171, 4
    %v1332 = vsel %vm1325, %v1329, %v1331
    %v1333 = vrot.slane %v172, 4
    %v1334 = vsel %vm1325, %v1331, %v1333
    %v1335 = vrot.slane %v173, 4
    %v1336 = vsel %vm1325, %v1333, %v1335
    %v1337 = vrot.slane %v174, 4
    %v1338 = vsel %vm1325, %v1335, %v1337
    %v1339 = vrot.slane %v175, 4
    %v1340 = vsel %vm1325, %v1337, %v1339
    %v1341 = vrot.slane %v176, 4
    %v1342 = vsel %vm1325, %v1339, %v1341
    %v1343 = vrot.slane %v177, 4
    %v1344 = vsel %vm1325, %v1341, %v1343
    %v1345 = vrot.slane %v178, 4
    %v1346 = vsel %vm1325, %v1343, %v1345
    %v1347 = vrot.slane %v179, 4
    %v1348 = vsel %vm1325, %v1345, %v1347
    %v1349 = vrot.slane %v180, 4
    %v1350 = vsel %vm1325, %v1347, %v1349
    %v1351 = vrot.slane %v181, 4
    %v1352 = vsel %vm1325, %v1349, %v1351
    %v1353 = vrot.slane %v182, 4
    %v1354 = vsel %vm1325, %v1351, %v1353
    %v1355 = vrot.slane %v183, 4
    %v1356 = vsel %vm1325, %v1353, %v1355
    %v1357 = vrot.slane 0.0, 4
    %v1358 = vsel %vm1325, %v1355, %v1357
    %v1359 = vsel %vm453, %v1328, 0
    %v1361 = vsel %vm453, %v1330, 0
    %v1363 = vsel %vm453, %v1332, 0
    %v1365 = vsel %vm453, %v1334, 0
    %v1367 = vsel %vm453, %v1336, 0
    %v1369 = vsel %vm453, %v1338, 0
    %v1371 = vsel %vm453, %v1340, 0
    %v1373 = vsel %vm453, %v1342, 0
    %v1375 = vsel %vm453, %v1344, 0
    %v1377 = vsel %vm453, %v1346, 0
    %v1379 = vsel %vm453, %v1348, 0
    %v1381 = vsel %vm453, %v1350, 0
    %v1383 = vsel %vm453, %v1352, 0
    %v1385 = vsel %vm453, %v1354, 0
    %v1387 = vsel %vm453, %v1356, 0
    %v1389 = vsel %vm453, %v1358, 0
    %v1392 = vsel %vm486, %v1324, 0
    %1394 = vmatpush.msra.mxu0 0.0
    %1395 = vmatpush.msra.mxu0 0.0
    %1396 = vmatpush.msra.mxu0 0.0
    %1397 = vmatpush.msra.mxu0 0.0
    %1398 = vmatpush.msra.mxu0 0.0
    %1399 = vmatpush.msra.mxu0 0.0
    %1400 = vmatpush.msra.mxu0 0.0
    %1401 = vmatpush.msra.mxu0 0.0
    %1402 = vmatpush.msra.mxu0 0.0
    %1403 = vmatpush.msra.mxu0 0.0
    %1404 = vmatpush.msra.mxu0 0.0
    %1405 = vmatpush.msra.mxu0 0.0
    %1406 = vmatpush.msra.mxu0 %v1392
    %1407 = vmatpush.msra.mxu0 %v1323
    %1408 = vmatpush.msra.mxu0 %v1322
    %1409 = vmatpush.msra.mxu0 %v1321
    %1410 = vmatmul.f32.gmra.mxu0 %v1359
    %v1411 = vpop.f32.mrf.mxu0
    %v1412 = vadd.f32 0.0, %v1411
    %1413 = vmatmul.f32.gmra.mxu0 %v1361
    %v1414 = vpop.f32.mrf.mxu0
    %v1415 = vadd.f32 0.0, %v1414
    %1416 = vmatmul.f32.gmra.mxu0 %v1363
    %v1417 = vpop.f32.mrf.mxu0
    %v1418 = vadd.f32 0.0, %v1417
    %1419 = vmatmul.f32.gmra.mxu0 %v1365
    %v1420 = vpop.f32.mrf.mxu0
    %v1421 = vadd.f32 0.0, %v1420
    %1422 = vmatmul.f32.gmra.mxu0 %v1367
    %v1423 = vpop.f32.mrf.mxu0
    %v1424 = vadd.f32 0.0, %v1423
    %1425 = vmatmul.f32.gmra.mxu0 %v1369
    %v1426 = vpop.f32.mrf.mxu0
    %v1427 = vadd.f32 0.0, %v1426
    %1428 = vmatmul.f32.gmra.mxu0 %v1371
    %v1429 = vpop.f32.mrf.mxu0
    %v1430 = vadd.f32 0.0, %v1429
    %1431 = vmatmul.f32.gmra.mxu0 %v1373
    %v1432 = vpop.f32.mrf.mxu0
    %v1433 = vadd.f32 0.0, %v1432
    %1434 = vmatmul.f32.gmra.mxu0 %v1375
    %v1435 = vpop.f32.mrf.mxu0
    %v1436 = vadd.f32 0.0, %v1435
    %1437 = vmatmul.f32.gmra.mxu0 %v1377
    %v1438 = vpop.f32.mrf.mxu0
    %v1439 = vadd.f32 0.0, %v1438
    %1440 = vmatmul.f32.gmra.mxu0 %v1379
    %v1441 = vpop.f32.mrf.mxu0
    %v1442 = vadd.f32 0.0, %v1441
    %1443 = vmatmul.f32.gmra.mxu0 %v1381
    %v1444 = vpop.f32.mrf.mxu0
    %v1445 = vadd.f32 0.0, %v1444
    %1446 = vmatmul.f32.gmra.mxu0 %v1383
    %v1447 = vpop.f32.mrf.mxu0
    %v1448 = vadd.f32 0.0, %v1447
    %1449 = vmatmul.f32.gmra.mxu0 %v1385
    %v1450 = vpop.f32.mrf.mxu0
    %v1451 = vadd.f32 0.0, %v1450
    %1452 = vmatmul.f32.gmra.mxu0 %v1387
    %v1453 = vpop.f32.mrf.mxu0
    %v1454 = vadd.f32 0.0, %v1453
    %1455 = vmatmul.f32.gmra.mxu0 %v1389
    %v1456 = vpop.f32.mrf.mxu0
    %v1457 = vadd.f32 0.0, %v1456
    %1458 = vdwg.mxu0
    %v1459 = vadd.f32 %v1304, %v1412
    %v1460 = vadd.f32 %v1305, %v1415
    %v1461 = vadd.f32 %v1306, %v1418
    %v1462 = vadd.f32 %v1307, %v1421
    %v1463 = vadd.f32 %v1308, %v1424
    %v1464 = vadd.f32 %v1309, %v1427
    %v1465 = vadd.f32 %v1310, %v1430
    %v1466 = vadd.f32 %v1311, %v1433
    %v1467 = vadd.f32 %v1312, %v1436
    %v1468 = vadd.f32 %v1313, %v1439
    %v1469 = vadd.f32 %v1314, %v1442
    %v1470 = vadd.f32 %v1315, %v1445
    %v1471 = vadd.f32 %v1316, %v1448
    %v1472 = vadd.f32 %v1317, %v1451
    %v1473 = vadd.f32 %v1318, %v1454
    %v1474 = vadd.f32 %v1319, %v1457
    %v1475 = vld [vmem:[%s4] sm:$0x1]
    %v1477 = vperm.slane %v1475, 0
    %v1479 = vadd.f32 %v1459, %v1477
    %v1480 = vadd.f32 %v1460, %v1477
    %v1481 = vadd.f32 %v1461, %v1477
    %v1482 = vadd.f32 %v1462, %v1477
    %v1483 = vadd.f32 %v1463, %v1477
    %v1484 = vadd.f32 %v1464, %v1477
    %v1485 = vadd.f32 %v1465, %v1477
    %v1486 = vadd.f32 %v1466, %v1477
    %v1487 = vadd.f32 %v1467, %v1477
    %v1488 = vadd.f32 %v1468, %v1477
    %v1489 = vadd.f32 %v1469, %v1477
    %v1490 = vadd.f32 %v1470, %v1477
    %v1491 = vadd.f32 %v1471, %v1477
    %v1492 = vadd.f32 %v1472, %v1477
    %v1493 = vadd.f32 %v1473, %v1477
    %v1494 = vadd.f32 %v1474, %v1477
    %v1495 = vmax.f32 %v1479, 0.0
    %v1496 = vmax.f32 %v1480, 0.0
    %v1497 = vmax.f32 %v1481, 0.0
    %v1498 = vmax.f32 %v1482, 0.0
    %v1499 = vmax.f32 %v1483, 0.0
    %v1500 = vmax.f32 %v1484, 0.0
    %v1501 = vmax.f32 %v1485, 0.0
    %v1502 = vmax.f32 %v1486, 0.0
    %v1503 = vmax.f32 %v1487, 0.0
    %v1504 = vmax.f32 %v1488, 0.0
    %v1505 = vmax.f32 %v1489, 0.0
    %v1506 = vmax.f32 %v1490, 0.0
    %v1507 = vmax.f32 %v1491, 0.0
    %v1508 = vmax.f32 %v1492, 0.0
    %v1509 = vmax.f32 %v1493, 0.0
    %v1510 = vmax.f32 %v1494, 0.0
    %vm1511 = vcmp.lt.s32.totalorder %v377, 28
    %vm1512 = vcmp.lt.s32.totalorder %v378, 28
    %vm1513 = vcmp.lt.s32.totalorder %v379, 28
    %vm1514 = vcmp.lt.s32.totalorder %v380, 28
    %vm1515 = vcmp.lt.s32.totalorder %v381, 28
    %vm1516 = vcmp.lt.s32.totalorder %v382, 28
    %vm1517 = vcmp.lt.s32.totalorder %v383, 28
    %vm1518 = vcmp.lt.s32.totalorder %v384, 28
    %vm1519 = vcmp.lt.s32.totalorder %v385, 28
    %vm1520 = vcmp.lt.s32.totalorder %v386, 28
    %vm1521 = vcmp.lt.s32.totalorder %v387, 28
    %vm1522 = vcmp.lt.s32.totalorder %v388, 28
    %vm1523 = vcmp.lt.s32.totalorder %v389, 28
    %vm1524 = vcmp.lt.s32.totalorder %v390, 28
    %vm1525 = vcmp.lt.s32.totalorder %v391, 28
    %vm1526 = vcmp.lt.s32.totalorder %v392, 28
    %v1527 = vsel %vm1511, %v1495, 0.0
    %v1528 = vsel %vm1512, %v1496, 0.0
    %v1529 = vsel %vm1513, %v1497, 0.0
    %v1530 = vsel %vm1514, %v1498, 0.0
    %v1531 = vsel %vm1515, %v1499, 0.0
    %v1532 = vsel %vm1516, %v1500, 0.0
    %v1533 = vsel %vm1517, %v1501, 0.0
    %v1534 = vsel %vm1518, %v1502, 0.0
    %v1535 = vsel %vm1519, %v1503, 0.0
    %v1536 = vsel %vm1520, %v1504, 0.0
    %v1537 = vsel %vm1521, %v1505, 0.0
    %v1538 = vsel %vm1522, %v1506, 0.0
    %v1539 = vsel %vm1523, %v1507, 0.0
    %v1540 = vsel %vm1524, %v1508, 0.0
    %v1541 = vsel %vm1525, %v1509, 0.0
    %v1542 = vsel %vm1526, %v1510, 0.0
    %v1543 = vsel %vm878, %v1527, -inf
    %v1544 = vsel %vm878, %v1528, -inf
    %v1545 = vmax.f32 %v1543, %v1544
    %v1546 = vsel %vm878, %v1529, -inf
    %v1547 = vmax.f32 %v1545, %v1546
    %v1548 = vsel %vm878, %v1530, -inf
    %v1549 = vmax.f32 %v1547, %v1548
    %v1550 = vrot.slane %v1549, 4
    %v1551 = vmax.f32 %v1549, %v1550
    %v1552 = vrot.slane %v1551, 2
    %v1553 = vmax.f32 %v1551, %v1552
    %v1554 = vrot.slane %v1553, 1
    %v1555 = vmax.f32 %v1553, %v1554
    %v1556 = vsel %vm878, %v1531, -inf
    %v1557 = vsel %vm878, %v1532, -inf
    %v1558 = vmax.f32 %v1556, %v1557
    %v1559 = vsel %vm878, %v1533, -inf
    %v1560 = vmax.f32 %v1558, %v1559
    %v1561 = vsel %vm878, %v1534, -inf
    %v1562 = vmax.f32 %v1560, %v1561
    %v1563 = vrot.slane %v1562, 4
    %v1564 = vmax.f32 %v1562, %v1563
    %v1565 = vrot.slane %v1564, 2
    %v1566 = vmax.f32 %v1564, %v1565
    %v1567 = vrot.slane %v1566, 1
    %v1568 = vmax.f32 %v1566, %v1567
    %v1569 = vsel %vm878, %v1535, -inf
    %v1570 = vsel %vm878, %v1536, -inf
    %v1571 = vmax.f32 %v1569, %v1570
    %v1572 = vsel %vm878, %v1537, -inf
    %v1573 = vmax.f32 %v1571, %v1572
    %v1574 = vsel %vm878, %v1538, -inf
    %v1575 = vmax.f32 %v1573, %v1574
    %v1576 = vrot.slane %v1575, 4
    %v1577 = vmax.f32 %v1575, %v1576
    %v1578 = vrot.slane %v1577, 2
    %v1579 = vmax.f32 %v1577, %v1578
    %v1580 = vrot.slane %v1579, 1
    %v1581 = vmax.f32 %v1579, %v1580
    %v1582 = vsel %vm878, %v1539, -inf
    %v1583 = vsel %vm878, %v1540, -inf
    %v1584 = vmax.f32 %v1582, %v1583
    %v1585 = vsel %vm878, %v1541, -inf
    %v1586 = vmax.f32 %v1584, %v1585
    %v1587 = vsel %vm878, %v1542, -inf
    %v1588 = vmax.f32 %v1586, %v1587
    %v1589 = vrot.slane %v1588, 4
    %v1590 = vmax.f32 %v1588, %v1589
    %v1591 = vrot.slane %v1590, 2
    %v1592 = vmax.f32 %v1590, %v1591
    %v1593 = vrot.slane %v1592, 1
    %v1594 = vmax.f32 %v1592, %v1593
    %vm1599 = vcmask 1041409
    %v1600 = vsel %vm1599, %v904, %v891
    %vm1601 = vcmask 1042434
    %v1602 = vsel %vm1601, %v917, %v1600
    %vm1603 = vcmask 1043459
    %v1604 = vsel %vm1603, %v930, %v1602
    %v1610 = vsel %vm1599, %v1568, %v1555
    %v1611 = vsel %vm1601, %v1581, %v1610
    %v1612 = vsel %vm1603, %v1594, %v1611
    %1613 = vrot.lane.b32.xlu0 %v1612, 32
    %v1614 = vpop.permute.xlu0 %1613
    %v1616 = vsel %vm878, %v1604, %v1614
    %v1617 = vld [vmem:[%s5] sm:$0xff]
    %v1618 = vld [vmem:[%s5 + $0x8] sm:$0xff]
    %v1619 = vld [vmem:[%s5 + $0x10] sm:$0xff]
    %v1620 = vld [vmem:[%s5 + $0x18] sm:$0xff]
    %v1621 = vld [vmem:[%s5 + $0x20] sm:$0xff]
    %v1622 = vld [vmem:[%s5 + $0x28] sm:$0xff]
    %v1623 = vld [vmem:[%s5 + $0x30] sm:$0xff]
    %v1624 = vld [vmem:[%s5 + $0x38] sm:$0xff]
    %v1625 = vld [vmem:[%s6] sm:$0x1]
    %v1627 = vperm.slane %v1625, 0
    %vm1629 = vcmask 523264
    %v1631 = vsel %vm1629, %v1616, 0
    %1633 = vmatpush.msra.mxu0 0.0
    %1634 = vmatpush.msra.mxu0 0.0
    %1635 = vmatpush.msra.mxu0 0.0
    %1636 = vmatpush.msra.mxu0 0.0
    %1637 = vmatpush.msra.mxu0 0.0
    %1638 = vmatpush.msra.mxu0 0.0
    %1639 = vmatpush.msra.mxu0 0.0
    %1640 = vmatpush.msra.mxu0 0.0
    %1641 = vmatpush.msra.mxu0 %v1624
    %1642 = vmatpush.msra.mxu0 %v1623
    %1643 = vmatpush.msra.mxu0 %v1622
    %1644 = vmatpush.msra.mxu0 %v1621
    %1645 = vmatpush.msra.mxu0 %v1620
    %1646 = vmatpush.msra.mxu0 %v1619
    %1647 = vmatpush.msra.mxu0 %v1618
    %1648 = vmatpush.msra.mxu0 %v1617
    %1649 = vmatmul.f32.gmra.mxu0 %v1631
    %v1650 = vpop.f32.mrf.mxu0
    %v1651 = vadd.f32 %v1627, %v1650
    %1652 = vdwg.mxu0
    %v1653 = vmax.f32 %v1651, 0.0
    %v1654 = vld [vmem:[%s7] sm:$0xff]
    %v1655 = vld [vmem:[%s7 + $0x8] sm:$0xff]
    %v1656 = vld [vmem:[%s7 + $0x10] sm:$0xff]
    %v1657 = vld [vmem:[%s7 + $0x18] sm:$0xff]
    %v1658 = vld [vmem:[%s8] sm:$0x1]
    %v1660 = vperm.slane %v1658, 0
    %v1663 = vsel %vm878, %v1653, 0
    %1665 = vmatpush.msra.mxu0 0.0
    %1666 = vmatpush.msra.mxu0 0.0
    %1667 = vmatpush.msra.mxu0 0.0
    %1668 = vmatpush.msra.mxu0 0.0
    %1669 = vmatpush.msra.mxu0 0.0
    %1670 = vmatpush.msra.mxu0 0.0
    %1671 = vmatpush.msra.mxu0 0.0
    %1672 = vmatpush.msra.mxu0 0.0
    %1673 = vmatpush.msra.mxu0 0.0
    %1674 = vmatpush.msra.mxu0 0.0
    %1675 = vmatpush.msra.mxu0 0.0
    %1676 = vmatpush.msra.mxu0 0.0
    %1677 = vmatpush.msra.mxu0 %v1657
    %1678 = vmatpush.msra.mxu0 %v1656
    %1679 = vmatpush.msra.mxu0 %v1655
    %1680 = vmatpush.msra.mxu0 %v1654
    %1681 = vmatmul.f32.gmra.mxu0 %v1663
    %v1682 = vpop.f32.mrf.mxu0
    %v1683 = vadd.f32 %v1660, %v1682
    %1684 = vdwg.mxu0
    %vm1685 = vcmask 76800
    %1686 = vst.msk [vmem:[#allocation5] sm:$0xf] %vm1685, %v1683
    // Predicated region
    $region42: #{tpu_custom_call.1} parent=1 // pred_check
      _
    $region43: #{tpu_custom_call.1} parent=1 // pred_check_branch
      %1688 = sbr.rel (0) target = $region45
    $region44: #{tpu_custom_call.1} parent=1 // pred_region
      %1690 = vsyncadd [#allocation4], 0
      %s1692 = sshll.u32 [#allocation5], 4
      %s1693 = int_to_ptr.vmem [resolvable:$true] %s1692
      %s1694 = sshll.u32 %s9, 4
      %s1695 = int_to_ptr.hbm [resolvable:$true] %s1694
      %1697 = dma.vmem_to_hbm [thread:$0]  %s1693, 64, %s1695, [#allocation4]
    $region45: #{tpu_custom_call.1} parent=1 // pred_fallthru
      _
    // Predicated region
    $region46: #{tpu_custom_call.1} parent=1 // pred_check
      _
    $region47: #{tpu_custom_call.1} parent=1 // pred_check_branch
      %1699 = sbr.rel (0) target = $region49
    $region48: #{tpu_custom_call.1} parent=1 // pred_region
      %1701 = dma.done [#allocation4], 64
    $region49: #{tpu_custom_call.1} parent=1 // pred_fallthru
      _
    %1702 = vsyncpa [#allocation3], 1
    %1703 = vsyncpa [#allocation4], 1

</llo_original>
